<compile_context>
chip_gen: v6e
topology: v6e:2x2x1
jax: 0.10.0
libtpu: 0.0.40
codegen_flags: <defaults>
</compile_context>

<pallas_src>
import functools

import jax
import jax.numpy as jnp
from jax.experimental import pallas as pl
from jax.experimental.pallas import tpu as pltpu

BN_EPS = 1e-5        # PyTorch BatchNorm1d default
FUSED_MAX_B = 2048   # single-call fast path up to this (padded) batch size


# ----------------------------- kernel helpers -----------------------------

def _linear_relu_t(wt_ref, b_ref, h_in):
    """ReLU(W^T @ h_in + b) in batch-on-lanes layout -> (F_out, B_TILE)."""
    y = jnp.dot(wt_ref[...], h_in, preferred_element_type=jnp.float32) + b_ref[...]
    return jnp.maximum(y, 0.0)


def _mask_row(width, start, b_valid, need_mask):
    """(1, width) f32 validity mask over batch lanes; all-ones when no padding."""
    if not need_mask:
        return jnp.ones((1, width), jnp.float32)
    cols = start + jax.lax.broadcasted_iota(jnp.int32, (1, width), 1)
    return (cols < b_valid).astype(jnp.float32)


def _masked_stats(h, m_row):
    """(sum, sum_sq) over valid batch lanes via the (idle) MXU -> (2, F)."""
    dn = (((1,), (1,)), ((), ()))
    s = jax.lax.dot_general(m_row, h, dn, preferred_element_type=jnp.float32)
    s2 = jax.lax.dot_general(m_row, h * h, dn, preferred_element_type=jnp.float32)
    return jnp.concatenate([s, s2], axis=0)


# ----------------------- fused single-call kernel (small B) -----------------------

def fused_kernel(xt_ref, w1t_ref, b1_ref, g1_ref, be1_ref,
                 w2t_ref, b2_ref, g2_ref, be2_ref,
                 w3t_ref, b3_ref, o_ref, *, b_valid, need_mask):
    xt = xt_ref[...]                                   # (in_f, Bp)
    bp = xt.shape[1]
    m_row = _mask_row(bp, 0, b_valid, need_mask)       # (1, Bp)
    inv_n = 1.0 / b_valid

    def bn_scale_shift(h, g_ref, be_ref):
        stats = _masked_stats(h, m_row)                # (2, F)
        mean = stats[0:1] * inv_n
        var = stats[1:2] * inv_n - mean * mean         # biased batch variance
        scale = g_ref[...] * jax.lax.rsqrt(var + BN_EPS)
        shift = be_ref[...] - mean * scale
        return scale, shift                            # (1, F) each

    def fold(wt_ref, b_ref, scale, shift):
        # Fold BN affine of the *previous* layer into this layer's weights.
        wt_eff = wt_ref[...] * scale                   # (F_out, F_in) * (1, F_in)
        b_eff = b_ref[...] + jax.lax.dot_general(
            wt_ref[...], shift, (((1,), (1,)), ((), ())),
            preferred_element_type=jnp.float32)        # (F_out, 1)
        return wt_eff, b_eff

    h1 = _linear_relu_t(w1t_ref, b1_ref, xt)           # (h1f, Bp)
    sc1, sh1 = bn_scale_shift(h1, g1_ref, be1_ref)
    w2t_eff, b2_eff = fold(w2t_ref, b2_ref, sc1, sh1)

    h2 = jnp.maximum(
        jnp.dot(w2t_eff, h1, preferred_element_type=jnp.float32) + b2_eff, 0.0)
    sc2, sh2 = bn_scale_shift(h2, g2_ref, be2_ref)
    w3t_eff, b3_eff = fold(w3t_ref, b3_ref, sc2, sh2)

    out = jnp.dot(w3t_eff, h2, preferred_element_type=jnp.float32) + b3_eff
    o_ref[...] = out.astype(o_ref.dtype)               # (out_f, Bp), lane-dense


# ----------------------- tiled kernels (large B, 3 passes) -----------------------

def stats1_kernel(xt_ref, w1t_ref, b1_ref, s_ref, *, b_tile, b_valid, need_mask):
    h1 = _linear_relu_t(w1t_ref, b1_ref, xt_ref[...])
    m_row = _mask_row(b_tile, pl.program_id(0) * b_tile, b_valid, need_mask)
    s_ref[0] = _masked_stats(h1, m_row)


def stats2_kernel(xt_ref, w1t_ref, b1_ref, w2t_ref, b2_ref, s_ref,
                  *, b_tile, b_valid, need_mask):
    h1 = _linear_relu_t(w1t_ref, b1_ref, xt_ref[...])
    h2 = _linear_relu_t(w2t_ref, b2_ref, h1)           # BN1 folded into w2t/b2
    m_row = _mask_row(b_tile, pl.program_id(0) * b_tile, b_valid, need_mask)
    s_ref[0] = _masked_stats(h2, m_row)


def head_kernel(xt_ref, w1t_ref, b1_ref, w2t_ref, b2_ref, w3t_ref, b3_ref, o_ref):
    h1 = _linear_relu_t(w1t_ref, b1_ref, xt_ref[...])
    h2 = _linear_relu_t(w2t_ref, b2_ref, h1)           # BN1 folded
    out = jnp.dot(w3t_ref[...], h2,                    # BN2 folded into w3t/b3
                  preferred_element_type=jnp.float32) + b3_ref[...]
    o_ref[...] = out.astype(o_ref.dtype)               # (out_f, B_TILE)


# --------------------------------- wrappers ---------------------------------

def _resident(a):
    """Whole-array VMEM-resident BlockSpec (constant index map)."""
    return pl.BlockSpec(a.shape, lambda i, _n=a.ndim: (0,) * _n)


def _fused_forward(x, w1, b1, g1, be1, w2, b2, g2, be2, w3, b3):
    B, _ = x.shape
    out_f = w3.shape[1]
    bp = 128 * pl.cdiv(B, 128)
    xt = x.T                                           # batch on lanes
    if bp != B:
        xt = jnp.pad(xt, ((0, 0), (0, bp - B)))

    args = (xt, w1.T, b1.T, g1, be1, w2.T, b2.T, g2, be2, w3.T, b3.T)
    out = pl.pallas_call(
        functools.partial(fused_kernel, b_valid=B, need_mask=(bp != B)),
        out_shape=jax.ShapeDtypeStruct((out_f, bp), jnp.float32),
        grid=(1,),
        in_specs=[_resident(a) for a in args],
        out_specs=pl.BlockSpec((out_f, bp), lambda i: (0, 0)),
        compiler_params=pltpu.CompilerParams(dimension_semantics=("arbitrary",)),
    )(*args)
    return out[:, :B].T


def _tiled_forward(x, w1, b1, g1, be1, w2, b2, g2, be2, w3, b3):
    B, in_f = x.shape
    h1f, h2f = w1.shape[1], w2.shape[1]
    out_f = w3.shape[1]

    # >= 2 tiles (keeps v7x dual-TC sharding live), tiles multiple of 128, <= 1024.
    b_tile = min(1024, 128 * pl.cdiv(pl.cdiv(B, 2), 128))
    nt = pl.cdiv(B, b_tile)
    bp = nt * b_tile
    need_mask = bp != B

    xt = x.T                                           # batch on lanes
    if need_mask:
        xt = jnp.pad(xt, ((0, 0), (0, bp - B)))

    w1t, b1c = w1.T, b1.T
    cp = pltpu.CompilerParams(dimension_semantics=("parallel",))
    x_spec = pl.BlockSpec((in_f, b_tile), lambda i: (0, i))

    def bn_affine(partials, gamma, beta):
        s = jnp.sum(partials, axis=0)                  # (2, F) full-batch sums
        mean = s[0:1] / B
        var = s[1:2] / B - mean * mean                 # biased batch variance
        scale = gamma * jax.lax.rsqrt(var + BN_EPS)
        shift = beta - mean * scale
        return scale, shift                            # (1, F)

    # Pass 1: layer-1 batch statistics (per-tile MXU partials, combined in JAX).
    s1 = pl.pallas_call(
        functools.partial(stats1_kernel, b_tile=b_tile, b_valid=B,
                          need_mask=need_mask),
        out_shape=jax.ShapeDtypeStruct((nt, 2, h1f), jnp.float32),
        grid=(nt,),
        in_specs=[x_spec, _resident(w1t), _resident(b1c)],
        out_specs=pl.BlockSpec((1, 2, h1f), lambda i: (i, 0, 0)),
        compiler_params=cp,
    )(xt, w1t, b1c)
    scale1, shift1 = bn_affine(s1, g1, be1)

    # Fold BN1 into layer-2 weights (exact):  BN1(h1) @ W2 + b2 == h1 @ W2' + b2'.
    w2_eff = w2 * scale1.T
    b2_eff = b2 + shift1 @ w2
    w2t_eff, b2c_eff = w2_eff.T, b2_eff.T

    # Pass 2: layer-2 batch statistics (layer 1 recomputed; x is only 16 f/row).
    s2 = pl.pallas_call(
        functools.partial(stats2_kernel, b_tile=b_tile, b_valid=B,
                          need_mask=need_mask),
        out_shape=jax.ShapeDtypeStruct((nt, 2, h2f), jnp.float32),
        grid=(nt,),
        in_specs=[x_spec, _resident(w1t), _resident(b1c),
                  _resident(w2t_eff), _resident(b2c_eff)],
        out_specs=pl.BlockSpec((1, 2, h2f), lambda i: (i, 0, 0)),
        compiler_params=cp,
    )(xt, w1t, b1c, w2t_eff, b2c_eff)
    scale2, shift2 = bn_affine(s2, g2, be2)

    # Fold BN2 into the head.
    w3_eff = w3 * scale2.T
    b3_eff = b3 + shift2 @ w3
    w3t_eff, b3c_eff = w3_eff.T, b3_eff.T

    # Pass 3: full forward + head, lane-dense (out_f, B) output.
    out = pl.pallas_call(
        head_kernel,
        out_shape=jax.ShapeDtypeStruct((out_f, bp), jnp.float32),
        grid=(nt,),
        in_specs=[x_spec, _resident(w1t), _resident(b1c),
                  _resident(w2t_eff), _resident(b2c_eff),
                  _resident(w3t_eff), _resident(b3c_eff)],
        out_specs=pl.BlockSpec((out_f, b_tile), lambda i: (0, i)),
        compiler_params=cp,
    )(xt, w1t, b1c, w2t_eff, b2c_eff, w3t_eff, b3c_eff)

    return out[:, :B].T


def mlp_forward(x, params):
    """x: (B, in_features) f32.  params from init_params.  Returns (B, out_features)."""
    w1, b1, g1, be1, w2, b2, g2, be2, w3, b3 = params
    B = x.shape[0]
    if B <= FUSED_MAX_B:
        return _fused_forward(x, w1, b1, g1, be1, w2, b2, g2, be2, w3, b3)
    return _tiled_forward(x, w1, b1, g1, be1, w2, b2, g2, be2, w3, b3)


# ------------------------------ params / reference ------------------------------

def init_params(key, in_features, num_nodes, out_features):
    """Linear weights kaiming-normal stored (in, out); biases U(-1/sqrt(fan_in), ..);
    BatchNorm gamma=1, beta=0.  Biases/gamma/beta kept 2-D (1, out)."""
    dims = [in_features] + list(num_nodes)
    params = []
    for n_in, n_out in zip(dims[:-1], dims[1:]):
        key, kw, kb = jax.random.split(key, 3)
        w = jax.random.normal(kw, (n_in, n_out), jnp.float32) * jnp.sqrt(2.0 / n_in)
        bound = 1.0 / jnp.sqrt(float(n_in))
        b = jax.random.uniform(kb, (1, n_out), jnp.float32, -bound, bound)
        params += [w, b, jnp.ones((1, n_out), jnp.float32),
                   jnp.zeros((1, n_out), jnp.float32)]
    n_in = dims[-1]
    key, kw, kb = jax.random.split(key, 3)
    w = jax.random.normal(kw, (n_in, out_features), jnp.float32) * jnp.sqrt(2.0 / n_in)
    bound = 1.0 / jnp.sqrt(float(n_in))
    b = jax.random.uniform(kb, (1, out_features), jnp.float32, -bound, bound)
    params += [w, b]
    return params


def _ref_block(x, w, b, gamma, beta):
    y = jnp.maximum(jnp.dot(x, w) + b, 0.0)
    mean = jnp.mean(y, axis=0, keepdims=True)
    var = jnp.mean((y - mean) ** 2, axis=0, keepdims=True)   # biased, training mode
    return (y - mean) * jax.lax.rsqrt(var + BN_EPS) * gamma + beta


def mlp_reference(x, params):
    w1, b1, g1, be1, w2, b2, g2, be2, w3, b3 = params
    h = _ref_block(x, w1, b1, g1, be1)
    h = _ref_block(h, w2, b2, g2, be2)
    return jnp.dot(h, w3) + b3


# TODO(synk): BatchNorm running_mean/running_var buffer updates (PyTorch training
# side effect) are not materialized; the kernel uses training-mode batch stats only.

if __name__ == "__main__":
    key = jax.random.PRNGKey(0)
    k_x, k_p, k_x2 = jax.random.split(key, 3)

    IN_FEATURES = 16
    NUM_NODES = [32, 32]
    OUT_FEATURES = 1
    params = init_params(k_p, IN_FEATURES, NUM_NODES, OUT_FEATURES)

    fwd = jax.jit(lambda xx: mlp_forward(xx, params))

    # Small-batch (benchmark) case -> fused single-call path.
    B = 512
    x = jax.random.normal(k_x, (B, IN_FEATURES), jnp.float32)
    out = jax.block_until_ready(fwd(x))
    ref = mlp_reference(x, params)
    assert out.shape == (B, OUT_FEATURES)
    assert jnp.allclose(out, ref, atol=1e-3, rtol=1e-3), "fused path mismatch"

    # Large-batch case -> tiled multi-pass path (exercises padding + masking).
    B2 = 3000
    x2 = jax.random.normal(k_x2, (B2, IN_FEATURES), jnp.float32)
    out2 = jax.block_until_ready(fwd(x2))
    ref2 = mlp_reference(x2, params)
    assert out2.shape == (B2, OUT_FEATURES)
    assert jnp.allclose(out2, ref2, atol=1e-3, rtol=1e-3), "tiled path mismatch"

    print("KERNEL_OK")
</pallas_src>

<mosaic_0001>
module attributes {stable_mosaic.version = 11 : i64} {
  func.func @fused_kernel(%arg0: i32, %arg1: memref<16x512xf32, #tpu.memory_space<vmem>>, %arg2: memref<32x16xf32, #tpu.memory_space<vmem>>, %arg3: memref<32x1xf32, #tpu.memory_space<vmem>>, %arg4: memref<1x32xf32, #tpu.memory_space<vmem>>, %arg5: memref<1x32xf32, #tpu.memory_space<vmem>>, %arg6: memref<32x32xf32, #tpu.memory_space<vmem>>, %arg7: memref<32x1xf32, #tpu.memory_space<vmem>>, %arg8: memref<1x32xf32, #tpu.memory_space<vmem>>, %arg9: memref<1x32xf32, #tpu.memory_space<vmem>>, %arg10: memref<1x32xf32, #tpu.memory_space<vmem>>, %arg11: memref<1x1xf32, #tpu.memory_space<vmem>>, %arg12: memref<1x512xf32, #tpu.memory_space<vmem>>) attributes {dimension_semantics = [#tpu.dimension_semantics<arbitrary>], iteration_bounds = array<i64: 1>, scalar_prefetch = 0 : i64, scratch_operands = 0 : i64, tpu.core_type = #tpu.core_type<tc>, window_params = [{pipeline_mode = #tpu.pipeline_mode<synchronous>, transform_indices = @transform_0, window_bounds = array<i64: 16, 512>}, {pipeline_mode = #tpu.pipeline_mode<synchronous>, transform_indices = @transform_1, window_bounds = array<i64: 32, 16>}, {pipeline_mode = #tpu.pipeline_mode<synchronous>, transform_indices = @transform_2, window_bounds = array<i64: 32, 1>}, {pipeline_mode = #tpu.pipeline_mode<synchronous>, transform_indices = @transform_3, window_bounds = array<i64: 1, 32>}, {pipeline_mode = #tpu.pipeline_mode<synchronous>, transform_indices = @transform_4, window_bounds = array<i64: 1, 32>}, {pipeline_mode = #tpu.pipeline_mode<synchronous>, transform_indices = @transform_5, window_bounds = array<i64: 32, 32>}, {pipeline_mode = #tpu.pipeline_mode<synchronous>, transform_indices = @transform_6, window_bounds = array<i64: 32, 1>}, {pipeline_mode = #tpu.pipeline_mode<synchronous>, transform_indices = @transform_7, window_bounds = array<i64: 1, 32>}, {pipeline_mode = #tpu.pipeline_mode<synchronous>, transform_indices = @transform_8, window_bounds = array<i64: 1, 32>}, {pipeline_mode = #tpu.pipeline_mode<synchronous>, transform_indices = @transform_9, window_bounds = array<i64: 1, 32>}, {pipeline_mode = #tpu.pipeline_mode<synchronous>, transform_indices = @transform_10, window_bounds = array<i64: 1, 1>}, {pipeline_mode = #tpu.pipeline_mode<synchronous>, transform_indices = @transform_11, window_bounds = array<i64: 1, 512>}]} {
    %c0 = arith.constant 0 : index
    %c0_0 = arith.constant 0 : index
    %0 = vector.load %arg1[%c0, %c0_0] : memref<16x512xf32, #tpu.memory_space<vmem>>, vector<16x512xf32>
    %cst = arith.constant 1.000000e+00 : f32
    %1 = vector.broadcast %cst : f32 to vector<1x512xf32>
    %c0_1 = arith.constant 0 : index
    %c0_2 = arith.constant 0 : index
    %2 = vector.load %arg2[%c0_1, %c0_2] : memref<32x16xf32, #tpu.memory_space<vmem>>, vector<32x16xf32>
    %cst_3 = arith.constant dense<0.000000e+00> : vector<32x512xf32>
    %3 = tpu.matmul %2, %0, %cst_3 {dimension_numbers = #tpu.dot_dimension_numbers<[1], [0], [0], [1], [0, 0, 1, 1], [], []>} : vector<32x16xf32>, vector<16x512xf32>, vector<32x512xf32> -> vector<32x512xf32>
    %c0_4 = arith.constant 0 : index
    %c0_5 = arith.constant 0 : index
    %4 = vector.load %arg3[%c0_4, %c0_5] : memref<32x1xf32, #tpu.memory_space<vmem>>, vector<32x1xf32>
    %5 = vector.broadcast %4 : vector<32x1xf32> to vector<32x512xf32>
    %6 = arith.addf %3, %5 : vector<32x512xf32>
    %cst_6 = arith.constant 0.000000e+00 : f32
    %7 = vector.broadcast %cst_6 : f32 to vector<32x512xf32>
    %8 = arith.maximumf %6, %7 : vector<32x512xf32>
    %cst_7 = arith.constant dense<0.000000e+00> : vector<1x32xf32>
    %9 = tpu.matmul %1, %8, %cst_7 {dimension_numbers = #tpu.dot_dimension_numbers<[1], [1], [0], [0], [0, 0, 1, 0], [], []>} : vector<1x512xf32>, vector<32x512xf32>, vector<1x32xf32> -> vector<1x32xf32>
    %10 = arith.mulf %8, %8 : vector<32x512xf32>
    %cst_8 = arith.constant dense<0.000000e+00> : vector<1x32xf32>
    %11 = tpu.matmul %1, %10, %cst_8 {dimension_numbers = #tpu.dot_dimension_numbers<[1], [1], [0], [0], [0, 0, 1, 0], [], []>} : vector<1x512xf32>, vector<32x512xf32>, vector<1x32xf32> -> vector<1x32xf32>
    %12 = tpu.concatenate %9, %11 in 0 : vector<1x32xf32>, vector<1x32xf32> -> vector<2x32xf32>
    %13 = vector.extract_strided_slice %12 {offsets = [0, 0], sizes = [1, 32], strides = [1, 1]} : vector<2x32xf32> to vector<1x32xf32>
    %cst_9 = arith.constant 0.001953125 : f32
    %14 = vector.broadcast %cst_9 : f32 to vector<1x32xf32>
    %15 = arith.mulf %13, %14 : vector<1x32xf32>
    %16 = vector.extract_strided_slice %12 {offsets = [1, 0], sizes = [1, 32], strides = [1, 1]} : vector<2x32xf32> to vector<1x32xf32>
    %cst_10 = arith.constant 0.001953125 : f32
    %17 = vector.broadcast %cst_10 : f32 to vector<1x32xf32>
    %18 = arith.mulf %16, %17 : vector<1x32xf32>
    %19 = arith.mulf %15, %15 : vector<1x32xf32>
    %20 = arith.subf %18, %19 : vector<1x32xf32>
    %c0_11 = arith.constant 0 : index
    %c0_12 = arith.constant 0 : index
    %21 = vector.load %arg4[%c0_11, %c0_12] : memref<1x32xf32, #tpu.memory_space<vmem>>, vector<1x32xf32>
    %cst_13 = arith.constant 9.99999974E-6 : f32
    %22 = vector.broadcast %cst_13 : f32 to vector<1x32xf32>
    %23 = arith.addf %20, %22 : vector<1x32xf32>
    %24 = math.rsqrt %23 : vector<1x32xf32>
    %25 = arith.mulf %21, %24 : vector<1x32xf32>
    %c0_14 = arith.constant 0 : index
    %c0_15 = arith.constant 0 : index
    %26 = vector.load %arg5[%c0_14, %c0_15] : memref<1x32xf32, #tpu.memory_space<vmem>>, vector<1x32xf32>
    %27 = arith.mulf %15, %25 : vector<1x32xf32>
    %28 = arith.subf %26, %27 : vector<1x32xf32>
    %c0_16 = arith.constant 0 : index
    %c0_17 = arith.constant 0 : index
    %29 = vector.load %arg6[%c0_16, %c0_17] : memref<32x32xf32, #tpu.memory_space<vmem>>, vector<32x32xf32>
    %30 = vector.broadcast %25 : vector<1x32xf32> to vector<32x32xf32>
    %31 = arith.mulf %29, %30 : vector<32x32xf32>
    %c0_18 = arith.constant 0 : index
    %c0_19 = arith.constant 0 : index
    %32 = vector.load %arg7[%c0_18, %c0_19] : memref<32x1xf32, #tpu.memory_space<vmem>>, vector<32x1xf32>
    %c0_20 = arith.constant 0 : index
    %c0_21 = arith.constant 0 : index
    %33 = vector.load %arg6[%c0_20, %c0_21] : memref<32x32xf32, #tpu.memory_space<vmem>>, vector<32x32xf32>
    %cst_22 = arith.constant dense<0.000000e+00> : vector<32x1xf32>
    %34 = tpu.matmul %33, %28, %cst_22 {dimension_numbers = #tpu.dot_dimension_numbers<[1], [1], [0], [0], [0, 0, 1, 0], [], []>} : vector<32x32xf32>, vector<1x32xf32>, vector<32x1xf32> -> vector<32x1xf32>
    %35 = arith.addf %32, %34 : vector<32x1xf32>
    %cst_23 = arith.constant dense<0.000000e+00> : vector<32x512xf32>
    %36 = tpu.matmul %31, %8, %cst_23 {dimension_numbers = #tpu.dot_dimension_numbers<[1], [0], [0], [1], [0, 0, 1, 1], [], []>} : vector<32x32xf32>, vector<32x512xf32>, vector<32x512xf32> -> vector<32x512xf32>
    %37 = vector.broadcast %35 : vector<32x1xf32> to vector<32x512xf32>
    %38 = arith.addf %36, %37 : vector<32x512xf32>
    %cst_24 = arith.constant 0.000000e+00 : f32
    %39 = vector.broadcast %cst_24 : f32 to vector<32x512xf32>
    %40 = arith.maximumf %38, %39 : vector<32x512xf32>
    %cst_25 = arith.constant dense<0.000000e+00> : vector<1x32xf32>
    %41 = tpu.matmul %1, %40, %cst_25 {dimension_numbers = #tpu.dot_dimension_numbers<[1], [1], [0], [0], [0, 0, 1, 0], [], []>} : vector<1x512xf32>, vector<32x512xf32>, vector<1x32xf32> -> vector<1x32xf32>
    %42 = arith.mulf %40, %40 : vector<32x512xf32>
    %cst_26 = arith.constant dense<0.000000e+00> : vector<1x32xf32>
    %43 = tpu.matmul %1, %42, %cst_26 {dimension_numbers = #tpu.dot_dimension_numbers<[1], [1], [0], [0], [0, 0, 1, 0], [], []>} : vector<1x512xf32>, vector<32x512xf32>, vector<1x32xf32> -> vector<1x32xf32>
    %44 = tpu.concatenate %41, %43 in 0 : vector<1x32xf32>, vector<1x32xf32> -> vector<2x32xf32>
    %45 = vector.extract_strided_slice %44 {offsets = [0, 0], sizes = [1, 32], strides = [1, 1]} : vector<2x32xf32> to vector<1x32xf32>
    %cst_27 = arith.constant 0.001953125 : f32
    %46 = vector.broadcast %cst_27 : f32 to vector<1x32xf32>
    %47 = arith.mulf %45, %46 : vector<1x32xf32>
    %48 = vector.extract_strided_slice %44 {offsets = [1, 0], sizes = [1, 32], strides = [1, 1]} : vector<2x32xf32> to vector<1x32xf32>
    %cst_28 = arith.constant 0.001953125 : f32
    %49 = vector.broadcast %cst_28 : f32 to vector<1x32xf32>
    %50 = arith.mulf %48, %49 : vector<1x32xf32>
    %51 = arith.mulf %47, %47 : vector<1x32xf32>
    %52 = arith.subf %50, %51 : vector<1x32xf32>
    %c0_29 = arith.constant 0 : index
    %c0_30 = arith.constant 0 : index
    %53 = vector.load %arg8[%c0_29, %c0_30] : memref<1x32xf32, #tpu.memory_space<vmem>>, vector<1x32xf32>
    %cst_31 = arith.constant 9.99999974E-6 : f32
    %54 = vector.broadcast %cst_31 : f32 to vector<1x32xf32>
    %55 = arith.addf %52, %54 : vector<1x32xf32>
    %56 = math.rsqrt %55 : vector<1x32xf32>
    %57 = arith.mulf %53, %56 : vector<1x32xf32>
    %c0_32 = arith.constant 0 : index
    %c0_33 = arith.constant 0 : index
    %58 = vector.load %arg9[%c0_32, %c0_33] : memref<1x32xf32, #tpu.memory_space<vmem>>, vector<1x32xf32>
    %59 = arith.mulf %47, %57 : vector<1x32xf32>
    %60 = arith.subf %58, %59 : vector<1x32xf32>
    %c0_34 = arith.constant 0 : index
    %c0_35 = arith.constant 0 : index
    %61 = vector.load %arg10[%c0_34, %c0_35] : memref<1x32xf32, #tpu.memory_space<vmem>>, vector<1x32xf32>
    %62 = arith.mulf %61, %57 : vector<1x32xf32>
    %c0_36 = arith.constant 0 : index
    %c0_37 = arith.constant 0 : index
    %63 = vector.load %arg11[%c0_36, %c0_37] : memref<1x1xf32, #tpu.memory_space<vmem>>, vector<1x1xf32>
    %c0_38 = arith.constant 0 : index
    %c0_39 = arith.constant 0 : index
    %64 = vector.load %arg10[%c0_38, %c0_39] : memref<1x32xf32, #tpu.memory_space<vmem>>, vector<1x32xf32>
    %cst_40 = arith.constant dense<0.000000e+00> : vector<1x1xf32>
    %65 = tpu.matmul %64, %60, %cst_40 {dimension_numbers = #tpu.dot_dimension_numbers<[1], [1], [0], [0], [0, 0, 1, 0], [], []>} : vector<1x32xf32>, vector<1x32xf32>, vector<1x1xf32> -> vector<1x1xf32>
    %66 = arith.addf %63, %65 : vector<1x1xf32>
    %cst_41 = arith.constant dense<0.000000e+00> : vector<1x512xf32>
    %67 = tpu.matmul %62, %40, %cst_41 {dimension_numbers = #tpu.dot_dimension_numbers<[1], [0], [0], [1], [0, 0, 1, 1], [], []>} : vector<1x32xf32>, vector<32x512xf32>, vector<1x512xf32> -> vector<1x512xf32>
    %68 = vector.broadcast %66 : vector<1x1xf32> to vector<1x512xf32>
    %69 = arith.addf %67, %68 : vector<1x512xf32>
    %c0_42 = arith.constant 0 : index
    %c0_43 = arith.constant 0 : index
    %70 = vector.load %arg12[%c0_42, %c0_43] : memref<1x512xf32, #tpu.memory_space<vmem>>, vector<1x512xf32>
    tpu.vector_store %arg12[%c0_42, %c0_43], %69 {strides = array<i32>} : memref<1x512xf32, #tpu.memory_space<vmem>>, vector<1x512xf32>,
    return
  }
  func.func @transform_0(%arg0: i32) -> (i32, i32) {
    %c0_i32 = arith.constant 0 : i32
    %c0_i32_0 = arith.constant 0 : i32
    %c0_i32_1 = arith.constant 0 : i32
    return %c0_i32, %c0_i32_0 : i32, i32
  }
  func.func @transform_1(%arg0: i32) -> (i32, i32) {
    %c0_i32 = arith.constant 0 : i32
    %c0_i32_0 = arith.constant 0 : i32
    %c0_i32_1 = arith.constant 0 : i32
    return %c0_i32, %c0_i32_0 : i32, i32
  }
  func.func @transform_2(%arg0: i32) -> (i32, i32) {
    %c0_i32 = arith.constant 0 : i32
    %c0_i32_0 = arith.constant 0 : i32
    %c0_i32_1 = arith.constant 0 : i32
    return %c0_i32, %c0_i32_0 : i32, i32
  }
  func.func @transform_3(%arg0: i32) -> (i32, i32) {
    %c0_i32 = arith.constant 0 : i32
    %c0_i32_0 = arith.constant 0 : i32
    %c0_i32_1 = arith.constant 0 : i32
    return %c0_i32, %c0_i32_0 : i32, i32
  }
  func.func @transform_4(%arg0: i32) -> (i32, i32) {
    %c0_i32 = arith.constant 0 : i32
    %c0_i32_0 = arith.constant 0 : i32
    %c0_i32_1 = arith.constant 0 : i32
    return %c0_i32, %c0_i32_0 : i32, i32
  }
  func.func @transform_5(%arg0: i32) -> (i32, i32) {
    %c0_i32 = arith.constant 0 : i32
    %c0_i32_0 = arith.constant 0 : i32
    %c0_i32_1 = arith.constant 0 : i32
    return %c0_i32, %c0_i32_0 : i32, i32
  }
  func.func @transform_6(%arg0: i32) -> (i32, i32) {
    %c0_i32 = arith.constant 0 : i32
    %c0_i32_0 = arith.constant 0 : i32
    %c0_i32_1 = arith.constant 0 : i32
    return %c0_i32, %c0_i32_0 : i32, i32
  }
  func.func @transform_7(%arg0: i32) -> (i32, i32) {
    %c0_i32 = arith.constant 0 : i32
    %c0_i32_0 = arith.constant 0 : i32
    %c0_i32_1 = arith.constant 0 : i32
    return %c0_i32, %c0_i32_0 : i32, i32
  }
  func.func @transform_8(%arg0: i32) -> (i32, i32) {
    %c0_i32 = arith.constant 0 : i32
    %c0_i32_0 = arith.constant 0 : i32
    %c0_i32_1 = arith.constant 0 : i32
    return %c0_i32, %c0_i32_0 : i32, i32
  }
  func.func @transform_9(%arg0: i32) -> (i32, i32) {
    %c0_i32 = arith.constant 0 : i32
    %c0_i32_0 = arith.constant 0 : i32
    %c0_i32_1 = arith.constant 0 : i32
    return %c0_i32, %c0_i32_0 : i32, i32
  }
  func.func @transform_10(%arg0: i32) -> (i32, i32) {
    %c0_i32 = arith.constant 0 : i32
    %c0_i32_0 = arith.constant 0 : i32
    %c0_i32_1 = arith.constant 0 : i32
    return %c0_i32, %c0_i32_0 : i32, i32
  }
  func.func @transform_11(%arg0: i32) -> (i32, i32) {
    %c0_i32 = arith.constant 0 : i32
    %c0_i32_0 = arith.constant 0 : i32
    %c0_i32_1 = arith.constant 0 : i32
    return %c0_i32, %c0_i32_0 : i32, i32
  }
}

</mosaic_0001>

<llo_original>
// kernel: _lambda_.1
$region0: #{_lambda_.1}
  #allocation0 [shape = 'u32[]', space=smem, size = 0x4, offset = 0x4, fixed_abs, tag = 'smem constant byte address 0x4 - core index']
  #allocation1 [shape = 'u32[144,128]{1,0:T(1,128)}', space=vmem, size = 0x12000, scoped, tag = 'internal scratch']
  #allocation2 [shape = 'f32[1,1]{1,0:T(1,128)S(1)}', space=vmem, size = 0x200, scoped, tag = 'scoped memory for _lambda_.1']
  %s0 = inlined_call_operand.hbm [shape: f32[16,512], index: 0, kind: input, shape index: {}]
  %s1 = inlined_call_operand.hbm [shape: f32[32,16], index: 1, kind: input, shape index: {}]
  %s2 = inlined_call_operand.hbm [shape: f32[32,1], index: 2, kind: input, shape index: {}]
  %s3 = inlined_call_operand.vmem [shape: f32[1,32], index: 3, kind: input, shape index: {}, may-alias: {3,7}]
  %s4 = inlined_call_operand.vmem [shape: f32[1,32], index: 4, kind: input, shape index: {}, may-alias: {4,8}]
  %s5 = inlined_call_operand.hbm [shape: f32[32,32], index: 5, kind: input, shape index: {}]
  %s6 = inlined_call_operand.hbm [shape: f32[32,1], index: 6, kind: input, shape index: {}]
  %s7 = inlined_call_operand.vmem [shape: f32[1,32], index: 7, kind: input, shape index: {}, may-alias: {3,7}]
  %s8 = inlined_call_operand.vmem [shape: f32[1,32], index: 8, kind: input, shape index: {}, may-alias: {4,8}]
  %s9 = inlined_call_operand.vmem [shape: f32[1,32], index: 9, kind: input, shape index: {}]
  %s10 = inlined_call_operand.<no memory space> [shape: f32[1,1], index: 10, kind: input, shape index: {}]
  %s11 = inlined_call_operand.hbm [shape: f32[1,512], index: 11, kind: output, shape index: {}]
  %s12 = sld [smem:[#allocation0]]
  $region74: #{_lambda_.1} parent=0
    _
  %s14 = ssub.s32 1, %s12
  %s15 = scalar_select 0, %s14, %s12
  %v16 = vstv %s10
  %17 = vst [vmem:[#allocation2] sm:$0x1] %v16
  $region1: #{_lambda_.1} parent=0
    #allocation3 [shape = 'u8[32768]{0}', space=vmem, size = 0x8000, scoped, tag = 'input window, operand 0, single buffered']
    #allocation4 [shape = 's32[1]{0}', space=sflag, size = 0x4, scoped, tag = 'scoped memory for _lambda_.1']
    #allocation5 [shape = 's32[1]{0}', space=sflag, size = 0x4, scoped, tag = 'scoped memory for _lambda_.1']
    #allocation6 [shape = 'u8[16384]{0}', space=vmem, size = 0x4000, scoped, tag = 'input window, operand 1, single buffered']
    #allocation7 [shape = 's32[1]{0}', space=sflag, size = 0x4, scoped, tag = 'scoped memory for _lambda_.1']
    #allocation8 [shape = 'u8[16384]{0}', space=vmem, size = 0x4000, scoped, tag = 'input window, operand 2, single buffered']
    #allocation9 [shape = 'u8[16384]{0}', space=vmem, size = 0x4000, scoped, tag = 'input window, operand 5, single buffered']
    #allocation10 [shape = 's32[1]{0}', space=sflag, size = 0x4, scoped, tag = 'scoped memory for _lambda_.1']
    #allocation11 [shape = 'u8[16384]{0}', space=vmem, size = 0x4000, scoped, tag = 'input window, operand 6, single buffered']
    #allocation12 [shape = 'u8[2048]{0}', space=vmem, size = 0x800, scoped, tag = 'output window, operand 0, single buffered']
    %18 = vsyncpa [#allocation4], 0
    %19 = vsyncpa [#allocation7], 0
    %20 = vsyncpa [#allocation10], 0
    %21 = vsyncpa [#allocation5], 0
    // Predicated region
    $region2: #{_lambda_.1} parent=1 // pred_check
      _
    $region3: #{_lambda_.1} parent=1 // pred_check_branch
      %23 = sbr.rel (0) target = $region5
    $region4: #{_lambda_.1} parent=1 // pred_region
      %s25 = ssub.s32 1024, 1024
      %26 = vsyncadd [#allocation4], %s25
      %s27 = sshll.u32 [#allocation3], 4
      %s28 = int_to_ptr.vmem [resolvable:$true] %s27
      %33 = dma.hbm_to_vmem [thread:$0]  %s0, 1024, %s28, [#allocation4], 512, 512, 32
    $region5: #{_lambda_.1} parent=1 // pred_fallthru
      _
    // Predicated region
    $region6: #{_lambda_.1} parent=1 // pred_check
      _
    $region7: #{_lambda_.1} parent=1 // pred_check_branch
      %35 = sbr.rel (0) target = $region9
    $region8: #{_lambda_.1} parent=1 // pred_region
      %s37 = ssub.s32 512, 512
      %38 = vsyncadd [#allocation7], %s37
      %s39 = sshll.u32 [#allocation6], 4
      %s40 = int_to_ptr.vmem [resolvable:$true] %s39
      %45 = dma.hbm_to_vmem [thread:$0]  %s1, 512, %s40, [#allocation7], 128, 128, 8
    $region9: #{_lambda_.1} parent=1 // pred_fallthru
      _
    // Predicated region
    $region10: #{_lambda_.1} parent=1 // pred_check
      _
    $region11: #{_lambda_.1} parent=1 // pred_check_branch
      %47 = sbr.rel (0) target = $region13
    $region12: #{_lambda_.1} parent=1 // pred_region
      %s49 = ssub.s32 512, 512
      %50 = vsyncadd [#allocation7], %s49
      %s51 = sshll.u32 [#allocation8], 4
      %s52 = int_to_ptr.vmem [resolvable:$true] %s51
      %57 = dma.hbm_to_vmem [thread:$0]  %s2, 512, %s52, [#allocation7], 128, 128, 8
    $region13: #{_lambda_.1} parent=1 // pred_fallthru
      _
    // Predicated region
    $region14: #{_lambda_.1} parent=1 // pred_check
      _
    $region15: #{_lambda_.1} parent=1 // pred_check_branch
      %59 = sbr.rel (0) target = $region17
    $region16: #{_lambda_.1} parent=1 // pred_region
      _
    $region17: #{_lambda_.1} parent=1 // pred_fallthru
      _
    // Predicated region
    $region18: #{_lambda_.1} parent=1 // pred_check
      _
    $region19: #{_lambda_.1} parent=1 // pred_check_branch
      %61 = sbr.rel (0) target = $region21
    $region20: #{_lambda_.1} parent=1 // pred_region
      _
    $region21: #{_lambda_.1} parent=1 // pred_fallthru
      _
    // Predicated region
    $region22: #{_lambda_.1} parent=1 // pred_check
      _
    $region23: #{_lambda_.1} parent=1 // pred_check_branch
      %63 = sbr.rel (0) target = $region25
    $region24: #{_lambda_.1} parent=1 // pred_region
      %s65 = ssub.s32 512, 512
      %66 = vsyncadd [#allocation10], %s65
      %s67 = sshll.u32 [#allocation9], 4
      %s68 = int_to_ptr.vmem [resolvable:$true] %s67
      %73 = dma.hbm_to_vmem [thread:$0]  %s5, 512, %s68, [#allocation10], 128, 128, 8
    $region25: #{_lambda_.1} parent=1 // pred_fallthru
      _
    // Predicated region
    $region26: #{_lambda_.1} parent=1 // pred_check
      _
    $region27: #{_lambda_.1} parent=1 // pred_check_branch
      %75 = sbr.rel (0) target = $region29
    $region28: #{_lambda_.1} parent=1 // pred_region
      %s77 = ssub.s32 512, 512
      %78 = vsyncadd [#allocation10], %s77
      %s79 = sshll.u32 [#allocation11], 4
      %s80 = int_to_ptr.vmem [resolvable:$true] %s79
      %85 = dma.hbm_to_vmem [thread:$0]  %s6, 512, %s80, [#allocation10], 128, 128, 8
    $region29: #{_lambda_.1} parent=1 // pred_fallthru
      _
    // Predicated region
    $region30: #{_lambda_.1} parent=1 // pred_check
      _
    $region31: #{_lambda_.1} parent=1 // pred_check_branch
      %87 = sbr.rel (0) target = $region33
    $region32: #{_lambda_.1} parent=1 // pred_region
      _
    $region33: #{_lambda_.1} parent=1 // pred_fallthru
      _
    // Predicated region
    $region34: #{_lambda_.1} parent=1 // pred_check
      _
    $region35: #{_lambda_.1} parent=1 // pred_check_branch
      %89 = sbr.rel (0) target = $region37
    $region36: #{_lambda_.1} parent=1 // pred_region
      _
    $region37: #{_lambda_.1} parent=1 // pred_fallthru
      _
    // Predicated region
    $region38: #{_lambda_.1} parent=1 // pred_check
      _
    $region39: #{_lambda_.1} parent=1 // pred_check_branch
      %91 = sbr.rel (0) target = $region41
    $region40: #{_lambda_.1} parent=1 // pred_region
      _
    $region41: #{_lambda_.1} parent=1 // pred_fallthru
      _
    // Predicated region
    $region42: #{_lambda_.1} parent=1 // pred_check
      _
    $region43: #{_lambda_.1} parent=1 // pred_check_branch
      %93 = sbr.rel (0) target = $region45
    $region44: #{_lambda_.1} parent=1 // pred_region
      _
    $region45: #{_lambda_.1} parent=1 // pred_fallthru
      _
    // Predicated region
    $region46: #{_lambda_.1} parent=1 // pred_check
      _
    $region47: #{_lambda_.1} parent=1 // pred_check_branch
      %95 = sbr.rel (0) target = $region49
    $region48: #{_lambda_.1} parent=1 // pred_region
      %96 = dma.done [#allocation4], 1024
    $region49: #{_lambda_.1} parent=1 // pred_fallthru
      _
    // Predicated region
    $region50: #{_lambda_.1} parent=1 // pred_check
      _
    $region51: #{_lambda_.1} parent=1 // pred_check_branch
      %98 = sbr.rel (0) target = $region53
    $region52: #{_lambda_.1} parent=1 // pred_region
      %99 = dma.done [#allocation7], 512
    $region53: #{_lambda_.1} parent=1 // pred_fallthru
      _
    // Predicated region
    $region54: #{_lambda_.1} parent=1 // pred_check
      _
    $region55: #{_lambda_.1} parent=1 // pred_check_branch
      %101 = sbr.rel (0) target = $region57
    $region56: #{_lambda_.1} parent=1 // pred_region
      %102 = dma.done [#allocation7], 512
    $region57: #{_lambda_.1} parent=1 // pred_fallthru
      _
    // Predicated region
    $region58: #{_lambda_.1} parent=1 // pred_check
      _
    $region59: #{_lambda_.1} parent=1 // pred_check_branch
      %104 = sbr.rel (0) target = $region61
    $region60: #{_lambda_.1} parent=1 // pred_region
      %105 = dma.done [#allocation10], 512
    $region61: #{_lambda_.1} parent=1 // pred_fallthru
      _
    // Predicated region
    $region62: #{_lambda_.1} parent=1 // pred_check
      _
    $region63: #{_lambda_.1} parent=1 // pred_check_branch
      %107 = sbr.rel (0) target = $region65
    $region64: #{_lambda_.1} parent=1 // pred_region
      %108 = dma.done [#allocation10], 512
    $region65: #{_lambda_.1} parent=1 // pred_fallthru
      _
    %v109 = vld [vmem:[#allocation3] sm:$0xff]
    %v110 = vld [vmem:[#allocation3 + $0x8] sm:$0xff]
    %v111 = vld [vmem:[#allocation3 + $0x10] sm:$0xff]
    %v112 = vld [vmem:[#allocation3 + $0x18] sm:$0xff]
    %v113 = vld [vmem:[#allocation3 + $0x20] sm:$0xff]
    %v114 = vld [vmem:[#allocation3 + $0x28] sm:$0xff]
    %v115 = vld [vmem:[#allocation3 + $0x30] sm:$0xff]
    %v116 = vld [vmem:[#allocation3 + $0x38] sm:$0xff]
    %v117 = vld [vmem:[#allocation6] sm:$0xff]
    %v118 = vld [vmem:[#allocation6 + $0x8] sm:$0xff]
    %v119 = vld [vmem:[#allocation6 + $0x10] sm:$0xff]
    %v120 = vld [vmem:[#allocation6 + $0x18] sm:$0xff]
    %v121 = vld [vmem:[#allocation8] sm:$0xff]
    %v122 = vld [vmem:[#allocation8 + $0x8] sm:$0xff]
    %v123 = vld [vmem:[#allocation8 + $0x10] sm:$0xff]
    %v124 = vld [vmem:[#allocation8 + $0x18] sm:$0xff]
    %126 = vset.pattern.permute.xlu0 0
    %127 = vperm.xlu0 %126, %v121
    %v128 = vpop.permute.xlu0 %127
    %131 = vset.pattern.permute.xlu0 0
    %132 = vperm.xlu0 %131, %v122
    %v133 = vpop.permute.xlu0 %132
    %136 = vset.pattern.permute.xlu0 0
    %137 = vperm.xlu0 %136, %v123
    %v138 = vpop.permute.xlu0 %137
    %141 = vset.pattern.permute.xlu0 0
    %142 = vperm.xlu0 %141, %v124
    %v143 = vpop.permute.xlu0 %142
    %vm145 = vcmask 130048
    %v147 = vsel %vm145, %v117, 0
    %v150 = vsel %vm145, %v118, 0
    %v153 = vsel %vm145, %v119, 0
    %v156 = vsel %vm145, %v120, 0
    %158 = vmatprep.subr.mxu0 0.0
    %159 = vmatpush1.msra.mxu0 0.0
    %160 = vmatprep.subr.mxu0 0.0
    %161 = vmatpush1.msra.mxu0 0.0
    %162 = vmatprep.subr.mxu0 0.0
    %163 = vmatpush1.msra.mxu0 0.0
    %164 = vmatprep.subr.mxu0 0.0
    %165 = vmatpush1.msra.mxu0 0.0
    %166 = vmatprep.subr.mxu0 0.0
    %167 = vmatpush1.msra.mxu0 0.0
    %168 = vmatprep.subr.mxu0 0.0
    %169 = vmatpush1.msra.mxu0 0.0
    %170 = vmatprep.subr.mxu0 0.0
    %171 = vmatpush1.msra.mxu0 0.0
    %172 = vmatprep.subr.mxu0 0.0
    %173 = vmatpush1.msra.mxu0 0.0
    %174 = vmatprep.subr.mxu0 0.0
    %175 = vmatpush1.msra.mxu0 0.0
    %176 = vmatprep.subr.mxu0 0.0
    %177 = vmatpush1.msra.mxu0 0.0
    %178 = vmatprep.subr.mxu0 0.0
    %179 = vmatpush1.msra.mxu0 0.0
    %180 = vmatprep.subr.mxu0 0.0
    %181 = vmatpush1.msra.mxu0 0.0
    %182 = vmatprep.subr.mxu0 0.0
    %183 = vmatpush1.msra.mxu0 0.0
    %184 = vmatprep.subr.mxu0 0.0
    %185 = vmatpush1.msra.mxu0 0.0
    %186 = vmatprep.subr.mxu0 %v114
    %187 = vmatpush1.msra.mxu0 %v113
    %188 = vmatprep.subr.mxu0 %v110
    %189 = vmatpush1.msra.mxu0 %v109
    %190 = vmatprep.subr.mxu0 0.0
    %191 = vmatpush2.msra.mxu0 0.0
    %192 = vmatprep.subr.mxu0 0.0
    %193 = vmatpush2.msra.mxu0 0.0
    %194 = vmatprep.subr.mxu0 0.0
    %195 = vmatpush2.msra.mxu0 0.0
    %196 = vmatprep.subr.mxu0 0.0
    %197 = vmatpush2.msra.mxu0 0.0
    %198 = vmatprep.subr.mxu0 0.0
    %199 = vmatpush2.msra.mxu0 0.0
    %200 = vmatprep.subr.mxu0 0.0
    %201 = vmatpush2.msra.mxu0 0.0
    %202 = vmatprep.subr.mxu0 0.0
    %203 = vmatpush2.msra.mxu0 0.0
    %204 = vmatprep.subr.mxu0 0.0
    %205 = vmatpush2.msra.mxu0 0.0
    %206 = vmatprep.subr.mxu0 0.0
    %207 = vmatpush2.msra.mxu0 0.0
    %208 = vmatprep.subr.mxu0 0.0
    %209 = vmatpush2.msra.mxu0 0.0
    %210 = vmatprep.subr.mxu0 0.0
    %211 = vmatpush2.msra.mxu0 0.0
    %212 = vmatprep.subr.mxu0 0.0
    %213 = vmatpush2.msra.mxu0 0.0
    %214 = vmatprep.subr.mxu0 0.0
    %215 = vmatpush2.msra.mxu0 0.0
    %216 = vmatprep.subr.mxu0 0.0
    %217 = vmatpush2.msra.mxu0 0.0
    %218 = vmatprep.subr.mxu0 0.0
    %219 = vmatpush2.msra.mxu0 0.0
    %220 = vmatprep.subr.mxu0 0.0
    %221 = vmatpush2.msra.mxu0 0.0
    %222 = vmatprep.mubr.f32.mxu0 0.0
    %223 = vmatmul.mubr.f32.gmra.mxu0 %v147
    %v224 = vpop.f32.mrf.mxu0
    %v225 = vadd.f32 %v128, %v224
    %v226 = vpop.f32.mrf.mxu0
    %v227 = vadd.f32 %v128, %v226
    %228 = vmatprep.mubr.f32.mxu0 0.0
    %229 = vmatmul.mubr.f32.gmra.mxu0 %v150
    %v230 = vpop.f32.mrf.mxu0
    %v231 = vadd.f32 %v133, %v230
    %v232 = vpop.f32.mrf.mxu0
    %v233 = vadd.f32 %v133, %v232
    %234 = vmatprep.mubr.f32.mxu0 0.0
    %235 = vmatmul.mubr.f32.gmra.mxu0 %v153
    %v236 = vpop.f32.mrf.mxu0
    %v237 = vadd.f32 %v138, %v236
    %v238 = vpop.f32.mrf.mxu0
    %v239 = vadd.f32 %v138, %v238
    %240 = vmatprep.mubr.f32.mxu0 0.0
    %241 = vmatmul.mubr.f32.gmra.mxu0 %v156
    %v242 = vpop.f32.mrf.mxu0
    %v243 = vadd.f32 %v143, %v242
    %v244 = vpop.f32.mrf.mxu0
    %v245 = vadd.f32 %v143, %v244
    %246 = vdwg.mxu0
    %247 = vmatprep.subr.mxu0 0.0
    %248 = vmatpush1.msra.mxu0 0.0
    %249 = vmatprep.subr.mxu0 0.0
    %250 = vmatpush1.msra.mxu0 0.0
    %251 = vmatprep.subr.mxu0 0.0
    %252 = vmatpush1.msra.mxu0 0.0
    %253 = vmatprep.subr.mxu0 0.0
    %254 = vmatpush1.msra.mxu0 0.0
    %255 = vmatprep.subr.mxu0 0.0
    %256 = vmatpush1.msra.mxu0 0.0
    %257 = vmatprep.subr.mxu0 0.0
    %258 = vmatpush1.msra.mxu0 0.0
    %259 = vmatprep.subr.mxu0 0.0
    %260 = vmatpush1.msra.mxu0 0.0
    %261 = vmatprep.subr.mxu0 0.0
    %262 = vmatpush1.msra.mxu0 0.0
    %263 = vmatprep.subr.mxu0 0.0
    %264 = vmatpush1.msra.mxu0 0.0
    %265 = vmatprep.subr.mxu0 0.0
    %266 = vmatpush1.msra.mxu0 0.0
    %267 = vmatprep.subr.mxu0 0.0
    %268 = vmatpush1.msra.mxu0 0.0
    %269 = vmatprep.subr.mxu0 0.0
    %270 = vmatpush1.msra.mxu0 0.0
    %271 = vmatprep.subr.mxu0 0.0
    %272 = vmatpush1.msra.mxu0 0.0
    %273 = vmatprep.subr.mxu0 0.0
    %274 = vmatpush1.msra.mxu0 0.0
    %275 = vmatprep.subr.mxu0 %v116
    %276 = vmatpush1.msra.mxu0 %v115
    %277 = vmatprep.subr.mxu0 %v112
    %278 = vmatpush1.msra.mxu0 %v111
    %279 = vmatprep.subr.mxu0 0.0
    %280 = vmatpush2.msra.mxu0 0.0
    %281 = vmatprep.subr.mxu0 0.0
    %282 = vmatpush2.msra.mxu0 0.0
    %283 = vmatprep.subr.mxu0 0.0
    %284 = vmatpush2.msra.mxu0 0.0
    %285 = vmatprep.subr.mxu0 0.0
    %286 = vmatpush2.msra.mxu0 0.0
    %287 = vmatprep.subr.mxu0 0.0
    %288 = vmatpush2.msra.mxu0 0.0
    %289 = vmatprep.subr.mxu0 0.0
    %290 = vmatpush2.msra.mxu0 0.0
    %291 = vmatprep.subr.mxu0 0.0
    %292 = vmatpush2.msra.mxu0 0.0
    %293 = vmatprep.subr.mxu0 0.0
    %294 = vmatpush2.msra.mxu0 0.0
    %295 = vmatprep.subr.mxu0 0.0
    %296 = vmatpush2.msra.mxu0 0.0
    %297 = vmatprep.subr.mxu0 0.0
    %298 = vmatpush2.msra.mxu0 0.0
    %299 = vmatprep.subr.mxu0 0.0
    %300 = vmatpush2.msra.mxu0 0.0
    %301 = vmatprep.subr.mxu0 0.0
    %302 = vmatpush2.msra.mxu0 0.0
    %303 = vmatprep.subr.mxu0 0.0
    %304 = vmatpush2.msra.mxu0 0.0
    %305 = vmatprep.subr.mxu0 0.0
    %306 = vmatpush2.msra.mxu0 0.0
    %307 = vmatprep.subr.mxu0 0.0
    %308 = vmatpush2.msra.mxu0 0.0
    %309 = vmatprep.subr.mxu0 0.0
    %310 = vmatpush2.msra.mxu0 0.0
    %311 = vmatprep.mubr.f32.mxu0 0.0
    %312 = vmatmul.mubr.f32.gmra.mxu0 %v147
    %v313 = vpop.f32.mrf.mxu0
    %v314 = vadd.f32 %v128, %v313
    %v315 = vpop.f32.mrf.mxu0
    %v316 = vadd.f32 %v128, %v315
    %317 = vmatprep.mubr.f32.mxu0 0.0
    %318 = vmatmul.mubr.f32.gmra.mxu0 %v150
    %v319 = vpop.f32.mrf.mxu0
    %v320 = vadd.f32 %v133, %v319
    %v321 = vpop.f32.mrf.mxu0
    %v322 = vadd.f32 %v133, %v321
    %323 = vmatprep.mubr.f32.mxu0 0.0
    %324 = vmatmul.mubr.f32.gmra.mxu0 %v153
    %v325 = vpop.f32.mrf.mxu0
    %v326 = vadd.f32 %v138, %v325
    %v327 = vpop.f32.mrf.mxu0
    %v328 = vadd.f32 %v138, %v327
    %329 = vmatprep.mubr.f32.mxu0 0.0
    %330 = vmatmul.mubr.f32.gmra.mxu0 %v156
    %v331 = vpop.f32.mrf.mxu0
    %v332 = vadd.f32 %v143, %v331
    %v333 = vpop.f32.mrf.mxu0
    %v334 = vadd.f32 %v143, %v333
    %335 = vdwg.mxu0
    %v336 = vmax.f32 %v225, 0.0
    %v337 = vmax.f32 %v227, 0.0
    %v338 = vmax.f32 %v314, 0.0
    %v339 = vmax.f32 %v316, 0.0
    %v340 = vmax.f32 %v231, 0.0
    %v341 = vmax.f32 %v233, 0.0
    %v342 = vmax.f32 %v320, 0.0
    %v343 = vmax.f32 %v322, 0.0
    %v344 = vmax.f32 %v237, 0.0
    %v345 = vmax.f32 %v239, 0.0
    %v346 = vmax.f32 %v326, 0.0
    %v347 = vmax.f32 %v328, 0.0
    %v348 = vmax.f32 %v243, 0.0
    %v349 = vmax.f32 %v245, 0.0
    %v350 = vmax.f32 %v332, 0.0
    %v351 = vmax.f32 %v334, 0.0
    %352 = vmatprep.subr.mxu0 0.0
    %353 = vmatpush1.xpose.msra.mxu0 0.0
    %354 = vmatprep.subr.mxu0 0.0
    %355 = vmatpush1.xpose.msra.mxu0 0.0
    %356 = vmatprep.subr.mxu0 0.0
    %357 = vmatpush1.xpose.msra.mxu0 0.0
    %358 = vmatprep.subr.mxu0 0.0
    %359 = vmatpush1.xpose.msra.mxu0 0.0
    %360 = vmatprep.subr.mxu0 0.0
    %361 = vmatpush1.xpose.msra.mxu0 0.0
    %362 = vmatprep.subr.mxu0 0.0
    %363 = vmatpush1.xpose.msra.mxu0 0.0
    %364 = vmatprep.subr.mxu0 0.0
    %365 = vmatpush1.xpose.msra.mxu0 0.0
    %366 = vmatprep.subr.mxu0 0.0
    %367 = vmatpush1.xpose.msra.mxu0 0.0
    %368 = vmatprep.subr.mxu0 0.0
    %369 = vmatpush1.xpose.msra.mxu0 0.0
    %370 = vmatprep.subr.mxu0 0.0
    %371 = vmatpush1.xpose.msra.mxu0 0.0
    %372 = vmatprep.subr.mxu0 0.0
    %373 = vmatpush1.xpose.msra.mxu0 0.0
    %374 = vmatprep.subr.mxu0 0.0
    %375 = vmatpush1.xpose.msra.mxu0 0.0
    %376 = vmatprep.subr.mxu0 %v349
    %377 = vmatpush1.xpose.msra.mxu0 %v348
    %378 = vmatprep.subr.mxu0 %v345
    %379 = vmatpush1.xpose.msra.mxu0 %v344
    %380 = vmatprep.subr.mxu0 %v341
    %381 = vmatpush1.xpose.msra.mxu0 %v340
    %382 = vmatprep.subr.mxu0 %v337
    %383 = vmatpush1.xpose.msra.mxu0 %v336
    %384 = vmatprep.subr.mxu0 0.0
    %385 = vmatpush2.xpose.msra.mxu0 0.0
    %386 = vmatprep.subr.mxu0 0.0
    %387 = vmatpush2.xpose.msra.mxu0 0.0
    %388 = vmatprep.subr.mxu0 0.0
    %389 = vmatpush2.xpose.msra.mxu0 0.0
    %390 = vmatprep.subr.mxu0 0.0
    %391 = vmatpush2.xpose.msra.mxu0 0.0
    %392 = vmatprep.subr.mxu0 0.0
    %393 = vmatpush2.xpose.msra.mxu0 0.0
    %394 = vmatprep.subr.mxu0 0.0
    %395 = vmatpush2.xpose.msra.mxu0 0.0
    %396 = vmatprep.subr.mxu0 0.0
    %397 = vmatpush2.xpose.msra.mxu0 0.0
    %398 = vmatprep.subr.mxu0 0.0
    %399 = vmatpush2.xpose.msra.mxu0 0.0
    %400 = vmatprep.subr.mxu0 0.0
    %401 = vmatpush2.xpose.msra.mxu0 0.0
    %402 = vmatprep.subr.mxu0 0.0
    %403 = vmatpush2.xpose.msra.mxu0 0.0
    %404 = vmatprep.subr.mxu0 0.0
    %405 = vmatpush2.xpose.msra.mxu0 0.0
    %406 = vmatprep.subr.mxu0 0.0
    %407 = vmatpush2.xpose.msra.mxu0 0.0
    %408 = vmatprep.subr.mxu0 0.0
    %409 = vmatpush2.xpose.msra.mxu0 0.0
    %410 = vmatprep.subr.mxu0 0.0
    %411 = vmatpush2.xpose.msra.mxu0 0.0
    %412 = vmatprep.subr.mxu0 0.0
    %413 = vmatpush2.xpose.msra.mxu0 0.0
    %414 = vmatprep.subr.mxu0 0.0
    %415 = vmatpush2.xpose.msra.mxu0 0.0
    %416 = vmatprep.mubr.f32.mxu0 1.0
    %417 = vmatmul.mubr.f32.gmra.mxu0 1.0
    %v418 = vpop.f32.mrf.mxu0
    %v419 = vadd.f32 0.0, %v418
    %v420 = vpop.f32.mrf.mxu0
    %421 = vdwg.mxu0
    %422 = vmatprep.subr.mxu0 0.0
    %423 = vmatpush1.xpose.msra.mxu0 0.0
    %424 = vmatprep.subr.mxu0 0.0
    %425 = vmatpush1.xpose.msra.mxu0 0.0
    %426 = vmatprep.subr.mxu0 0.0
    %427 = vmatpush1.xpose.msra.mxu0 0.0
    %428 = vmatprep.subr.mxu0 0.0
    %429 = vmatpush1.xpose.msra.mxu0 0.0
    %430 = vmatprep.subr.mxu0 0.0
    %431 = vmatpush1.xpose.msra.mxu0 0.0
    %432 = vmatprep.subr.mxu0 0.0
    %433 = vmatpush1.xpose.msra.mxu0 0.0
    %434 = vmatprep.subr.mxu0 0.0
    %435 = vmatpush1.xpose.msra.mxu0 0.0
    %436 = vmatprep.subr.mxu0 0.0
    %437 = vmatpush1.xpose.msra.mxu0 0.0
    %438 = vmatprep.subr.mxu0 0.0
    %439 = vmatpush1.xpose.msra.mxu0 0.0
    %440 = vmatprep.subr.mxu0 0.0
    %441 = vmatpush1.xpose.msra.mxu0 0.0
    %442 = vmatprep.subr.mxu0 0.0
    %443 = vmatpush1.xpose.msra.mxu0 0.0
    %444 = vmatprep.subr.mxu0 0.0
    %445 = vmatpush1.xpose.msra.mxu0 0.0
    %446 = vmatprep.subr.mxu0 %v351
    %447 = vmatpush1.xpose.msra.mxu0 %v350
    %448 = vmatprep.subr.mxu0 %v347
    %449 = vmatpush1.xpose.msra.mxu0 %v346
    %450 = vmatprep.subr.mxu0 %v343
    %451 = vmatpush1.xpose.msra.mxu0 %v342
    %452 = vmatprep.subr.mxu0 %v339
    %453 = vmatpush1.xpose.msra.mxu0 %v338
    %454 = vmatprep.subr.mxu0 0.0
    %455 = vmatpush2.xpose.msra.mxu0 0.0
    %456 = vmatprep.subr.mxu0 0.0
    %457 = vmatpush2.xpose.msra.mxu0 0.0
    %458 = vmatprep.subr.mxu0 0.0
    %459 = vmatpush2.xpose.msra.mxu0 0.0
    %460 = vmatprep.subr.mxu0 0.0
    %461 = vmatpush2.xpose.msra.mxu0 0.0
    %462 = vmatprep.subr.mxu0 0.0
    %463 = vmatpush2.xpose.msra.mxu0 0.0
    %464 = vmatprep.subr.mxu0 0.0
    %465 = vmatpush2.xpose.msra.mxu0 0.0
    %466 = vmatprep.subr.mxu0 0.0
    %467 = vmatpush2.xpose.msra.mxu0 0.0
    %468 = vmatprep.subr.mxu0 0.0
    %469 = vmatpush2.xpose.msra.mxu0 0.0
    %470 = vmatprep.subr.mxu0 0.0
    %471 = vmatpush2.xpose.msra.mxu0 0.0
    %472 = vmatprep.subr.mxu0 0.0
    %473 = vmatpush2.xpose.msra.mxu0 0.0
    %474 = vmatprep.subr.mxu0 0.0
    %475 = vmatpush2.xpose.msra.mxu0 0.0
    %476 = vmatprep.subr.mxu0 0.0
    %477 = vmatpush2.xpose.msra.mxu0 0.0
    %478 = vmatprep.subr.mxu0 0.0
    %479 = vmatpush2.xpose.msra.mxu0 0.0
    %480 = vmatprep.subr.mxu0 0.0
    %481 = vmatpush2.xpose.msra.mxu0 0.0
    %482 = vmatprep.subr.mxu0 0.0
    %483 = vmatpush2.xpose.msra.mxu0 0.0
    %484 = vmatprep.subr.mxu0 0.0
    %485 = vmatpush2.xpose.msra.mxu0 0.0
    %486 = vmatprep.mubr.f32.mxu0 1.0
    %487 = vmatmul.mubr.f32.gmra.mxu0 1.0
    %v488 = vpop.f32.mrf.mxu0
    %v489 = vadd.f32 %v419, %v488
    %v490 = vpop.f32.mrf.mxu0
    %491 = vdwg.mxu0
    %v492 = vmul.f32 %v336, %v336
    %v493 = vmul.f32 %v337, %v337
    %v494 = vmul.f32 %v338, %v338
    %v495 = vmul.f32 %v339, %v339
    %v496 = vmul.f32 %v340, %v340
    %v497 = vmul.f32 %v341, %v341
    %v498 = vmul.f32 %v342, %v342
    %v499 = vmul.f32 %v343, %v343
    %v500 = vmul.f32 %v344, %v344
    %v501 = vmul.f32 %v345, %v345
    %v502 = vmul.f32 %v346, %v346
    %v503 = vmul.f32 %v347, %v347
    %v504 = vmul.f32 %v348, %v348
    %v505 = vmul.f32 %v349, %v349
    %v506 = vmul.f32 %v350, %v350
    %v507 = vmul.f32 %v351, %v351
    %508 = vmatprep.subr.mxu0 0.0
    %509 = vmatpush1.xpose.msra.mxu0 0.0
    %510 = vmatprep.subr.mxu0 0.0
    %511 = vmatpush1.xpose.msra.mxu0 0.0
    %512 = vmatprep.subr.mxu0 0.0
    %513 = vmatpush1.xpose.msra.mxu0 0.0
    %514 = vmatprep.subr.mxu0 0.0
    %515 = vmatpush1.xpose.msra.mxu0 0.0
    %516 = vmatprep.subr.mxu0 0.0
    %517 = vmatpush1.xpose.msra.mxu0 0.0
    %518 = vmatprep.subr.mxu0 0.0
    %519 = vmatpush1.xpose.msra.mxu0 0.0
    %520 = vmatprep.subr.mxu0 0.0
    %521 = vmatpush1.xpose.msra.mxu0 0.0
    %522 = vmatprep.subr.mxu0 0.0
    %523 = vmatpush1.xpose.msra.mxu0 0.0
    %524 = vmatprep.subr.mxu0 0.0
    %525 = vmatpush1.xpose.msra.mxu0 0.0
    %526 = vmatprep.subr.mxu0 0.0
    %527 = vmatpush1.xpose.msra.mxu0 0.0
    %528 = vmatprep.subr.mxu0 0.0
    %529 = vmatpush1.xpose.msra.mxu0 0.0
    %530 = vmatprep.subr.mxu0 0.0
    %531 = vmatpush1.xpose.msra.mxu0 0.0
    %532 = vmatprep.subr.mxu0 %v505
    %533 = vmatpush1.xpose.msra.mxu0 %v504
    %534 = vmatprep.subr.mxu0 %v501
    %535 = vmatpush1.xpose.msra.mxu0 %v500
    %536 = vmatprep.subr.mxu0 %v497
    %537 = vmatpush1.xpose.msra.mxu0 %v496
    %538 = vmatprep.subr.mxu0 %v493
    %539 = vmatpush1.xpose.msra.mxu0 %v492
    %540 = vmatprep.subr.mxu0 0.0
    %541 = vmatpush2.xpose.msra.mxu0 0.0
    %542 = vmatprep.subr.mxu0 0.0
    %543 = vmatpush2.xpose.msra.mxu0 0.0
    %544 = vmatprep.subr.mxu0 0.0
    %545 = vmatpush2.xpose.msra.mxu0 0.0
    %546 = vmatprep.subr.mxu0 0.0
    %547 = vmatpush2.xpose.msra.mxu0 0.0
    %548 = vmatprep.subr.mxu0 0.0
    %549 = vmatpush2.xpose.msra.mxu0 0.0
    %550 = vmatprep.subr.mxu0 0.0
    %551 = vmatpush2.xpose.msra.mxu0 0.0
    %552 = vmatprep.subr.mxu0 0.0
    %553 = vmatpush2.xpose.msra.mxu0 0.0
    %554 = vmatprep.subr.mxu0 0.0
    %555 = vmatpush2.xpose.msra.mxu0 0.0
    %556 = vmatprep.subr.mxu0 0.0
    %557 = vmatpush2.xpose.msra.mxu0 0.0
    %558 = vmatprep.subr.mxu0 0.0
    %559 = vmatpush2.xpose.msra.mxu0 0.0
    %560 = vmatprep.subr.mxu0 0.0
    %561 = vmatpush2.xpose.msra.mxu0 0.0
    %562 = vmatprep.subr.mxu0 0.0
    %563 = vmatpush2.xpose.msra.mxu0 0.0
    %564 = vmatprep.subr.mxu0 0.0
    %565 = vmatpush2.xpose.msra.mxu0 0.0
    %566 = vmatprep.subr.mxu0 0.0
    %567 = vmatpush2.xpose.msra.mxu0 0.0
    %568 = vmatprep.subr.mxu0 0.0
    %569 = vmatpush2.xpose.msra.mxu0 0.0
    %570 = vmatprep.subr.mxu0 0.0
    %571 = vmatpush2.xpose.msra.mxu0 0.0
    %572 = vmatprep.mubr.f32.mxu0 1.0
    %573 = vmatmul.mubr.f32.gmra.mxu0 1.0
    %v574 = vpop.f32.mrf.mxu0
    %v575 = vadd.f32 0.0, %v574
    %v576 = vpop.f32.mrf.mxu0
    %577 = vdwg.mxu0
    %578 = vmatprep.subr.mxu0 0.0
    %579 = vmatpush1.xpose.msra.mxu0 0.0
    %580 = vmatprep.subr.mxu0 0.0
    %581 = vmatpush1.xpose.msra.mxu0 0.0
    %582 = vmatprep.subr.mxu0 0.0
    %583 = vmatpush1.xpose.msra.mxu0 0.0
    %584 = vmatprep.subr.mxu0 0.0
    %585 = vmatpush1.xpose.msra.mxu0 0.0
    %586 = vmatprep.subr.mxu0 0.0
    %587 = vmatpush1.xpose.msra.mxu0 0.0
    %588 = vmatprep.subr.mxu0 0.0
    %589 = vmatpush1.xpose.msra.mxu0 0.0
    %590 = vmatprep.subr.mxu0 0.0
    %591 = vmatpush1.xpose.msra.mxu0 0.0
    %592 = vmatprep.subr.mxu0 0.0
    %593 = vmatpush1.xpose.msra.mxu0 0.0
    %594 = vmatprep.subr.mxu0 0.0
    %595 = vmatpush1.xpose.msra.mxu0 0.0
    %596 = vmatprep.subr.mxu0 0.0
    %597 = vmatpush1.xpose.msra.mxu0 0.0
    %598 = vmatprep.subr.mxu0 0.0
    %599 = vmatpush1.xpose.msra.mxu0 0.0
    %600 = vmatprep.subr.mxu0 0.0
    %601 = vmatpush1.xpose.msra.mxu0 0.0
    %602 = vmatprep.subr.mxu0 %v507
    %603 = vmatpush1.xpose.msra.mxu0 %v506
    %604 = vmatprep.subr.mxu0 %v503
    %605 = vmatpush1.xpose.msra.mxu0 %v502
    %606 = vmatprep.subr.mxu0 %v499
    %607 = vmatpush1.xpose.msra.mxu0 %v498
    %608 = vmatprep.subr.mxu0 %v495
    %609 = vmatpush1.xpose.msra.mxu0 %v494
    %610 = vmatprep.subr.mxu0 0.0
    %611 = vmatpush2.xpose.msra.mxu0 0.0
    %612 = vmatprep.subr.mxu0 0.0
    %613 = vmatpush2.xpose.msra.mxu0 0.0
    %614 = vmatprep.subr.mxu0 0.0
    %615 = vmatpush2.xpose.msra.mxu0 0.0
    %616 = vmatprep.subr.mxu0 0.0
    %617 = vmatpush2.xpose.msra.mxu0 0.0
    %618 = vmatprep.subr.mxu0 0.0
    %619 = vmatpush2.xpose.msra.mxu0 0.0
    %620 = vmatprep.subr.mxu0 0.0
    %621 = vmatpush2.xpose.msra.mxu0 0.0
    %622 = vmatprep.subr.mxu0 0.0
    %623 = vmatpush2.xpose.msra.mxu0 0.0
    %624 = vmatprep.subr.mxu0 0.0
    %625 = vmatpush2.xpose.msra.mxu0 0.0
    %626 = vmatprep.subr.mxu0 0.0
    %627 = vmatpush2.xpose.msra.mxu0 0.0
    %628 = vmatprep.subr.mxu0 0.0
    %629 = vmatpush2.xpose.msra.mxu0 0.0
    %630 = vmatprep.subr.mxu0 0.0
    %631 = vmatpush2.xpose.msra.mxu0 0.0
    %632 = vmatprep.subr.mxu0 0.0
    %633 = vmatpush2.xpose.msra.mxu0 0.0
    %634 = vmatprep.subr.mxu0 0.0
    %635 = vmatpush2.xpose.msra.mxu0 0.0
    %636 = vmatprep.subr.mxu0 0.0
    %637 = vmatpush2.xpose.msra.mxu0 0.0
    %638 = vmatprep.subr.mxu0 0.0
    %639 = vmatpush2.xpose.msra.mxu0 0.0
    %640 = vmatprep.subr.mxu0 0.0
    %641 = vmatpush2.xpose.msra.mxu0 0.0
    %642 = vmatprep.mubr.f32.mxu0 1.0
    %643 = vmatmul.mubr.f32.gmra.mxu0 1.0
    %v644 = vpop.f32.mrf.mxu0
    %v645 = vadd.f32 %v575, %v644
    %v646 = vpop.f32.mrf.mxu0
    %647 = vdwg.mxu0
    %v649 = vrot.slane %v645, 7
    %vm651 = vcmask 1040384
    %v652 = vsel %vm651, %v489, %v649
    %v653 = vmul.f32 %v652, 0.001953125
    %v654 = vmul.f32 %v653, %v653
    %v656 = vrot.slane %v654, 7
    %v658 = vsub.f32 %v653, %v656
    %v659 = vld [vmem:[%s3] sm:$0x1]
    %v660 = vadd.f32 %v658, 1e-05
    %v661 = vrsqrt.pop %v660
    %v664 = vunpack.c.l.s4 1966171168
    %v665 = vunpack.c.0.s8 %v664
    %v666 = vlaneseq
    %v667 = vshrl.u32 %v666, 7
    %v668 = vsub.s32 %v665, %v667
    %v669 = vrot.slane %v661, %v668
    %v670 = vcombine.high %v669, %v669
    %v672 = vunpack.c.l.s4 1966171168
    %v673 = vunpack.c.0.s8 %v672
    %v674 = vlaneseq
    %v675 = vshrl.u32 %v674, 7
    %v676 = vsub.s32 %v673, %v675
    %v677 = vrot.slane %v670, %v676
    %v679 = vmul.f32 %v659, %v677
    %v680 = vld [vmem:[%s4] sm:$0x1]
    %v681 = vmul.f32 %v653, %v679
    %v682 = vsub.f32 %v680, %v681
    %v683 = vld [vmem:[#allocation9] sm:$0xff]
    %v684 = vld [vmem:[#allocation9 + $0x8] sm:$0xff]
    %v685 = vld [vmem:[#allocation9 + $0x10] sm:$0xff]
    %v686 = vld [vmem:[#allocation9 + $0x18] sm:$0xff]
    %v688 = vlaneseq
    %v689 = vshrl.u32 %v688, 7
    %v690 = vsub.s32 0, %v689
    %v691 = vrot.slane %v679, %v690
    %v693 = vmul.f32 %v683, %v691
    %v694 = vmul.f32 %v684, %v691
    %v695 = vmul.f32 %v685, %v691
    %v696 = vmul.f32 %v686, %v691
    %v697 = vld [vmem:[#allocation11] sm:$0xff]
    %v698 = vld [vmem:[#allocation11 + $0x8] sm:$0xff]
    %v699 = vld [vmem:[#allocation11 + $0x10] sm:$0xff]
    %v700 = vld [vmem:[#allocation11 + $0x18] sm:$0xff]
    %v702 = vlaneseq
    %v703 = vshrl.u32 %v702, 7
    %v704 = vsub.s32 0, %v703
    %v705 = vrot.slane %v682, %v704
    %v707 = vmul.f32 %v683, %v705
    %v708 = vmul.f32 %v684, %v705
    %v709 = vmul.f32 %v685, %v705
    %v710 = vmul.f32 %v686, %v705
    %vm711 = vcmask 261120
    %v712 = vsel %vm711, %v707, 0.0
    %713 = vadd.xlane.f32.xlu0 %v712
    %v714 = vpop.xlane.xlu0 %713
    %v715 = vsel %vm711, %v708, 0.0
    %716 = vadd.xlane.f32.xlu0 %v715
    %v717 = vpop.xlane.xlu0 %716
    %v718 = vsel %vm711, %v709, 0.0
    %719 = vadd.xlane.f32.xlu0 %v718
    %v720 = vpop.xlane.xlu0 %719
    %v721 = vsel %vm711, %v710, 0.0
    %722 = vadd.xlane.f32.xlu0 %v721
    %v723 = vpop.xlane.xlu0 %722
    %v724 = vadd.f32 %v697, %v714
    %v725 = vadd.f32 %v698, %v717
    %v726 = vadd.f32 %v699, %v720
    %v727 = vadd.f32 %v700, %v723
    %729 = vset.pattern.permute.xlu0 0
    %730 = vperm.xlu0 %729, %v724
    %v731 = vpop.permute.xlu0 %730
    %734 = vset.pattern.permute.xlu0 0
    %735 = vperm.xlu0 %734, %v725
    %v736 = vpop.permute.xlu0 %735
    %739 = vset.pattern.permute.xlu0 0
    %740 = vperm.xlu0 %739, %v726
    %v741 = vpop.permute.xlu0 %740
    %744 = vset.pattern.permute.xlu0 0
    %745 = vperm.xlu0 %744, %v727
    %v746 = vpop.permute.xlu0 %745
    %v749 = vsel %vm711, %v693, 0
    %v752 = vsel %vm711, %v694, 0
    %v755 = vsel %vm711, %v695, 0
    %v758 = vsel %vm711, %v696, 0
    %760 = vmatprep.subr.mxu0 0.0
    %761 = vmatpush1.msra.mxu0 0.0
    %762 = vmatprep.subr.mxu0 0.0
    %763 = vmatpush1.msra.mxu0 0.0
    %764 = vmatprep.subr.mxu0 0.0
    %765 = vmatpush1.msra.mxu0 0.0
    %766 = vmatprep.subr.mxu0 0.0
    %767 = vmatpush1.msra.mxu0 0.0
    %768 = vmatprep.subr.mxu0 0.0
    %769 = vmatpush1.msra.mxu0 0.0
    %770 = vmatprep.subr.mxu0 0.0
    %771 = vmatpush1.msra.mxu0 0.0
    %772 = vmatprep.subr.mxu0 0.0
    %773 = vmatpush1.msra.mxu0 0.0
    %774 = vmatprep.subr.mxu0 0.0
    %775 = vmatpush1.msra.mxu0 0.0
    %776 = vmatprep.subr.mxu0 0.0
    %777 = vmatpush1.msra.mxu0 0.0
    %778 = vmatprep.subr.mxu0 0.0
    %779 = vmatpush1.msra.mxu0 0.0
    %780 = vmatprep.subr.mxu0 0.0
    %781 = vmatpush1.msra.mxu0 0.0
    %782 = vmatprep.subr.mxu0 0.0
    %783 = vmatpush1.msra.mxu0 0.0
    %784 = vmatprep.subr.mxu0 %v349
    %785 = vmatpush1.msra.mxu0 %v348
    %786 = vmatprep.subr.mxu0 %v345
    %787 = vmatpush1.msra.mxu0 %v344
    %788 = vmatprep.subr.mxu0 %v341
    %789 = vmatpush1.msra.mxu0 %v340
    %790 = vmatprep.subr.mxu0 %v337
    %791 = vmatpush1.msra.mxu0 %v336
    %792 = vmatprep.subr.mxu0 0.0
    %793 = vmatpush2.msra.mxu0 0.0
    %794 = vmatprep.subr.mxu0 0.0
    %795 = vmatpush2.msra.mxu0 0.0
    %796 = vmatprep.subr.mxu0 0.0
    %797 = vmatpush2.msra.mxu0 0.0
    %798 = vmatprep.subr.mxu0 0.0
    %799 = vmatpush2.msra.mxu0 0.0
    %800 = vmatprep.subr.mxu0 0.0
    %801 = vmatpush2.msra.mxu0 0.0
    %802 = vmatprep.subr.mxu0 0.0
    %803 = vmatpush2.msra.mxu0 0.0
    %804 = vmatprep.subr.mxu0 0.0
    %805 = vmatpush2.msra.mxu0 0.0
    %806 = vmatprep.subr.mxu0 0.0
    %807 = vmatpush2.msra.mxu0 0.0
    %808 = vmatprep.subr.mxu0 0.0
    %809 = vmatpush2.msra.mxu0 0.0
    %810 = vmatprep.subr.mxu0 0.0
    %811 = vmatpush2.msra.mxu0 0.0
    %812 = vmatprep.subr.mxu0 0.0
    %813 = vmatpush2.msra.mxu0 0.0
    %814 = vmatprep.subr.mxu0 0.0
    %815 = vmatpush2.msra.mxu0 0.0
    %816 = vmatprep.subr.mxu0 0.0
    %817 = vmatpush2.msra.mxu0 0.0
    %818 = vmatprep.subr.mxu0 0.0
    %819 = vmatpush2.msra.mxu0 0.0
    %820 = vmatprep.subr.mxu0 0.0
    %821 = vmatpush2.msra.mxu0 0.0
    %822 = vmatprep.subr.mxu0 0.0
    %823 = vmatpush2.msra.mxu0 0.0
    %824 = vmatprep.mubr.f32.mxu0 0.0
    %825 = vmatmul.mubr.f32.gmra.mxu0 %v749
    %v826 = vpop.f32.mrf.mxu0
    %v827 = vadd.f32 %v731, %v826
    %v828 = vpop.f32.mrf.mxu0
    %v829 = vadd.f32 %v731, %v828
    %830 = vmatprep.mubr.f32.mxu0 0.0
    %831 = vmatmul.mubr.f32.gmra.mxu0 %v752
    %v832 = vpop.f32.mrf.mxu0
    %v833 = vadd.f32 %v736, %v832
    %v834 = vpop.f32.mrf.mxu0
    %v835 = vadd.f32 %v736, %v834
    %836 = vmatprep.mubr.f32.mxu0 0.0
    %837 = vmatmul.mubr.f32.gmra.mxu0 %v755
    %v838 = vpop.f32.mrf.mxu0
    %v839 = vadd.f32 %v741, %v838
    %v840 = vpop.f32.mrf.mxu0
    %v841 = vadd.f32 %v741, %v840
    %842 = vmatprep.mubr.f32.mxu0 0.0
    %843 = vmatmul.mubr.f32.gmra.mxu0 %v758
    %v844 = vpop.f32.mrf.mxu0
    %v845 = vadd.f32 %v746, %v844
    %v846 = vpop.f32.mrf.mxu0
    %v847 = vadd.f32 %v746, %v846
    %848 = vdwg.mxu0
    %849 = vmatprep.subr.mxu0 0.0
    %850 = vmatpush1.msra.mxu0 0.0
    %851 = vmatprep.subr.mxu0 0.0
    %852 = vmatpush1.msra.mxu0 0.0
    %853 = vmatprep.subr.mxu0 0.0
    %854 = vmatpush1.msra.mxu0 0.0
    %855 = vmatprep.subr.mxu0 0.0
    %856 = vmatpush1.msra.mxu0 0.0
    %857 = vmatprep.subr.mxu0 0.0
    %858 = vmatpush1.msra.mxu0 0.0
    %859 = vmatprep.subr.mxu0 0.0
    %860 = vmatpush1.msra.mxu0 0.0
    %861 = vmatprep.subr.mxu0 0.0
    %862 = vmatpush1.msra.mxu0 0.0
    %863 = vmatprep.subr.mxu0 0.0
    %864 = vmatpush1.msra.mxu0 0.0
    %865 = vmatprep.subr.mxu0 0.0
    %866 = vmatpush1.msra.mxu0 0.0
    %867 = vmatprep.subr.mxu0 0.0
    %868 = vmatpush1.msra.mxu0 0.0
    %869 = vmatprep.subr.mxu0 0.0
    %870 = vmatpush1.msra.mxu0 0.0
    %871 = vmatprep.subr.mxu0 0.0
    %872 = vmatpush1.msra.mxu0 0.0
    %873 = vmatprep.subr.mxu0 %v351
    %874 = vmatpush1.msra.mxu0 %v350
    %875 = vmatprep.subr.mxu0 %v347
    %876 = vmatpush1.msra.mxu0 %v346
    %877 = vmatprep.subr.mxu0 %v343
    %878 = vmatpush1.msra.mxu0 %v342
    %879 = vmatprep.subr.mxu0 %v339
    %880 = vmatpush1.msra.mxu0 %v338
    %881 = vmatprep.subr.mxu0 0.0
    %882 = vmatpush2.msra.mxu0 0.0
    %883 = vmatprep.subr.mxu0 0.0
    %884 = vmatpush2.msra.mxu0 0.0
    %885 = vmatprep.subr.mxu0 0.0
    %886 = vmatpush2.msra.mxu0 0.0
    %887 = vmatprep.subr.mxu0 0.0
    %888 = vmatpush2.msra.mxu0 0.0
    %889 = vmatprep.subr.mxu0 0.0
    %890 = vmatpush2.msra.mxu0 0.0
    %891 = vmatprep.subr.mxu0 0.0
    %892 = vmatpush2.msra.mxu0 0.0
    %893 = vmatprep.subr.mxu0 0.0
    %894 = vmatpush2.msra.mxu0 0.0
    %895 = vmatprep.subr.mxu0 0.0
    %896 = vmatpush2.msra.mxu0 0.0
    %897 = vmatprep.subr.mxu0 0.0
    %898 = vmatpush2.msra.mxu0 0.0
    %899 = vmatprep.subr.mxu0 0.0
    %900 = vmatpush2.msra.mxu0 0.0
    %901 = vmatprep.subr.mxu0 0.0
    %902 = vmatpush2.msra.mxu0 0.0
    %903 = vmatprep.subr.mxu0 0.0
    %904 = vmatpush2.msra.mxu0 0.0
    %905 = vmatprep.subr.mxu0 0.0
    %906 = vmatpush2.msra.mxu0 0.0
    %907 = vmatprep.subr.mxu0 0.0
    %908 = vmatpush2.msra.mxu0 0.0
    %909 = vmatprep.subr.mxu0 0.0
    %910 = vmatpush2.msra.mxu0 0.0
    %911 = vmatprep.subr.mxu0 0.0
    %912 = vmatpush2.msra.mxu0 0.0
    %913 = vmatprep.mubr.f32.mxu0 0.0
    %914 = vmatmul.mubr.f32.gmra.mxu0 %v749
    %v915 = vpop.f32.mrf.mxu0
    %v916 = vadd.f32 %v731, %v915
    %v917 = vpop.f32.mrf.mxu0
    %v918 = vadd.f32 %v731, %v917
    %919 = vmatprep.mubr.f32.mxu0 0.0
    %920 = vmatmul.mubr.f32.gmra.mxu0 %v752
    %v921 = vpop.f32.mrf.mxu0
    %v922 = vadd.f32 %v736, %v921
    %v923 = vpop.f32.mrf.mxu0
    %v924 = vadd.f32 %v736, %v923
    %925 = vmatprep.mubr.f32.mxu0 0.0
    %926 = vmatmul.mubr.f32.gmra.mxu0 %v755
    %v927 = vpop.f32.mrf.mxu0
    %v928 = vadd.f32 %v741, %v927
    %v929 = vpop.f32.mrf.mxu0
    %v930 = vadd.f32 %v741, %v929
    %931 = vmatprep.mubr.f32.mxu0 0.0
    %932 = vmatmul.mubr.f32.gmra.mxu0 %v758
    %v933 = vpop.f32.mrf.mxu0
    %v934 = vadd.f32 %v746, %v933
    %v935 = vpop.f32.mrf.mxu0
    %v936 = vadd.f32 %v746, %v935
    %937 = vdwg.mxu0
    %v938 = vmax.f32 %v827, 0.0
    %v939 = vmax.f32 %v829, 0.0
    %v940 = vmax.f32 %v916, 0.0
    %v941 = vmax.f32 %v918, 0.0
    %v942 = vmax.f32 %v833, 0.0
    %v943 = vmax.f32 %v835, 0.0
    %v944 = vmax.f32 %v922, 0.0
    %v945 = vmax.f32 %v924, 0.0
    %v946 = vmax.f32 %v839, 0.0
    %v947 = vmax.f32 %v841, 0.0
    %v948 = vmax.f32 %v928, 0.0
    %v949 = vmax.f32 %v930, 0.0
    %v950 = vmax.f32 %v845, 0.0
    %v951 = vmax.f32 %v847, 0.0
    %v952 = vmax.f32 %v934, 0.0
    %v953 = vmax.f32 %v936, 0.0
    %954 = vmatprep.subr.mxu0 0.0
    %955 = vmatpush1.xpose.msra.mxu0 0.0
    %956 = vmatprep.subr.mxu0 0.0
    %957 = vmatpush1.xpose.msra.mxu0 0.0
    %958 = vmatprep.subr.mxu0 0.0
    %959 = vmatpush1.xpose.msra.mxu0 0.0
    %960 = vmatprep.subr.mxu0 0.0
    %961 = vmatpush1.xpose.msra.mxu0 0.0
    %962 = vmatprep.subr.mxu0 0.0
    %963 = vmatpush1.xpose.msra.mxu0 0.0
    %964 = vmatprep.subr.mxu0 0.0
    %965 = vmatpush1.xpose.msra.mxu0 0.0
    %966 = vmatprep.subr.mxu0 0.0
    %967 = vmatpush1.xpose.msra.mxu0 0.0
    %968 = vmatprep.subr.mxu0 0.0
    %969 = vmatpush1.xpose.msra.mxu0 0.0
    %970 = vmatprep.subr.mxu0 0.0
    %971 = vmatpush1.xpose.msra.mxu0 0.0
    %972 = vmatprep.subr.mxu0 0.0
    %973 = vmatpush1.xpose.msra.mxu0 0.0
    %974 = vmatprep.subr.mxu0 0.0
    %975 = vmatpush1.xpose.msra.mxu0 0.0
    %976 = vmatprep.subr.mxu0 0.0
    %977 = vmatpush1.xpose.msra.mxu0 0.0
    %978 = vmatprep.subr.mxu0 %v951
    %979 = vmatpush1.xpose.msra.mxu0 %v950
    %980 = vmatprep.subr.mxu0 %v947
    %981 = vmatpush1.xpose.msra.mxu0 %v946
    %982 = vmatprep.subr.mxu0 %v943
    %983 = vmatpush1.xpose.msra.mxu0 %v942
    %984 = vmatprep.subr.mxu0 %v939
    %985 = vmatpush1.xpose.msra.mxu0 %v938
    %986 = vmatprep.subr.mxu0 0.0
    %987 = vmatpush2.xpose.msra.mxu0 0.0
    %988 = vmatprep.subr.mxu0 0.0
    %989 = vmatpush2.xpose.msra.mxu0 0.0
    %990 = vmatprep.subr.mxu0 0.0
    %991 = vmatpush2.xpose.msra.mxu0 0.0
    %992 = vmatprep.subr.mxu0 0.0
    %993 = vmatpush2.xpose.msra.mxu0 0.0
    %994 = vmatprep.subr.mxu0 0.0
    %995 = vmatpush2.xpose.msra.mxu0 0.0
    %996 = vmatprep.subr.mxu0 0.0
    %997 = vmatpush2.xpose.msra.mxu0 0.0
    %998 = vmatprep.subr.mxu0 0.0
    %999 = vmatpush2.xpose.msra.mxu0 0.0
    %1000 = vmatprep.subr.mxu0 0.0
    %1001 = vmatpush2.xpose.msra.mxu0 0.0
    %1002 = vmatprep.subr.mxu0 0.0
    %1003 = vmatpush2.xpose.msra.mxu0 0.0
    %1004 = vmatprep.subr.mxu0 0.0
    %1005 = vmatpush2.xpose.msra.mxu0 0.0
    %1006 = vmatprep.subr.mxu0 0.0
    %1007 = vmatpush2.xpose.msra.mxu0 0.0
    %1008 = vmatprep.subr.mxu0 0.0
    %1009 = vmatpush2.xpose.msra.mxu0 0.0
    %1010 = vmatprep.subr.mxu0 0.0
    %1011 = vmatpush2.xpose.msra.mxu0 0.0
    %1012 = vmatprep.subr.mxu0 0.0
    %1013 = vmatpush2.xpose.msra.mxu0 0.0
    %1014 = vmatprep.subr.mxu0 0.0
    %1015 = vmatpush2.xpose.msra.mxu0 0.0
    %1016 = vmatprep.subr.mxu0 0.0
    %1017 = vmatpush2.xpose.msra.mxu0 0.0
    %1018 = vmatprep.mubr.f32.mxu0 1.0
    %1019 = vmatmul.mubr.f32.gmra.mxu0 1.0
    %v1020 = vpop.f32.mrf.mxu0
    %v1021 = vadd.f32 0.0, %v1020
    %v1022 = vpop.f32.mrf.mxu0
    %1023 = vdwg.mxu0
    %1024 = vmatprep.subr.mxu0 0.0
    %1025 = vmatpush1.xpose.msra.mxu0 0.0
    %1026 = vmatprep.subr.mxu0 0.0
    %1027 = vmatpush1.xpose.msra.mxu0 0.0
    %1028 = vmatprep.subr.mxu0 0.0
    %1029 = vmatpush1.xpose.msra.mxu0 0.0
    %1030 = vmatprep.subr.mxu0 0.0
    %1031 = vmatpush1.xpose.msra.mxu0 0.0
    %1032 = vmatprep.subr.mxu0 0.0
    %1033 = vmatpush1.xpose.msra.mxu0 0.0
    %1034 = vmatprep.subr.mxu0 0.0
    %1035 = vmatpush1.xpose.msra.mxu0 0.0
    %1036 = vmatprep.subr.mxu0 0.0
    %1037 = vmatpush1.xpose.msra.mxu0 0.0
    %1038 = vmatprep.subr.mxu0 0.0
    %1039 = vmatpush1.xpose.msra.mxu0 0.0
    %1040 = vmatprep.subr.mxu0 0.0
    %1041 = vmatpush1.xpose.msra.mxu0 0.0
    %1042 = vmatprep.subr.mxu0 0.0
    %1043 = vmatpush1.xpose.msra.mxu0 0.0
    %1044 = vmatprep.subr.mxu0 0.0
    %1045 = vmatpush1.xpose.msra.mxu0 0.0
    %1046 = vmatprep.subr.mxu0 0.0
    %1047 = vmatpush1.xpose.msra.mxu0 0.0
    %1048 = vmatprep.subr.mxu0 %v953
    %1049 = vmatpush1.xpose.msra.mxu0 %v952
    %1050 = vmatprep.subr.mxu0 %v949
    %1051 = vmatpush1.xpose.msra.mxu0 %v948
    %1052 = vmatprep.subr.mxu0 %v945
    %1053 = vmatpush1.xpose.msra.mxu0 %v944
    %1054 = vmatprep.subr.mxu0 %v941
    %1055 = vmatpush1.xpose.msra.mxu0 %v940
    %1056 = vmatprep.subr.mxu0 0.0
    %1057 = vmatpush2.xpose.msra.mxu0 0.0
    %1058 = vmatprep.subr.mxu0 0.0
    %1059 = vmatpush2.xpose.msra.mxu0 0.0
    %1060 = vmatprep.subr.mxu0 0.0
    %1061 = vmatpush2.xpose.msra.mxu0 0.0
    %1062 = vmatprep.subr.mxu0 0.0
    %1063 = vmatpush2.xpose.msra.mxu0 0.0
    %1064 = vmatprep.subr.mxu0 0.0
    %1065 = vmatpush2.xpose.msra.mxu0 0.0
    %1066 = vmatprep.subr.mxu0 0.0
    %1067 = vmatpush2.xpose.msra.mxu0 0.0
    %1068 = vmatprep.subr.mxu0 0.0
    %1069 = vmatpush2.xpose.msra.mxu0 0.0
    %1070 = vmatprep.subr.mxu0 0.0
    %1071 = vmatpush2.xpose.msra.mxu0 0.0
    %1072 = vmatprep.subr.mxu0 0.0
    %1073 = vmatpush2.xpose.msra.mxu0 0.0
    %1074 = vmatprep.subr.mxu0 0.0
    %1075 = vmatpush2.xpose.msra.mxu0 0.0
    %1076 = vmatprep.subr.mxu0 0.0
    %1077 = vmatpush2.xpose.msra.mxu0 0.0
    %1078 = vmatprep.subr.mxu0 0.0
    %1079 = vmatpush2.xpose.msra.mxu0 0.0
    %1080 = vmatprep.subr.mxu0 0.0
    %1081 = vmatpush2.xpose.msra.mxu0 0.0
    %1082 = vmatprep.subr.mxu0 0.0
    %1083 = vmatpush2.xpose.msra.mxu0 0.0
    %1084 = vmatprep.subr.mxu0 0.0
    %1085 = vmatpush2.xpose.msra.mxu0 0.0
    %1086 = vmatprep.subr.mxu0 0.0
    %1087 = vmatpush2.xpose.msra.mxu0 0.0
    %1088 = vmatprep.mubr.f32.mxu0 1.0
    %1089 = vmatmul.mubr.f32.gmra.mxu0 1.0
    %v1090 = vpop.f32.mrf.mxu0
    %v1091 = vadd.f32 %v1021, %v1090
    %v1092 = vpop.f32.mrf.mxu0
    %1093 = vdwg.mxu0
    %v1094 = vmul.f32 %v938, %v938
    %v1095 = vmul.f32 %v939, %v939
    %v1096 = vmul.f32 %v940, %v940
    %v1097 = vmul.f32 %v941, %v941
    %v1098 = vmul.f32 %v942, %v942
    %v1099 = vmul.f32 %v943, %v943
    %v1100 = vmul.f32 %v944, %v944
    %v1101 = vmul.f32 %v945, %v945
    %v1102 = vmul.f32 %v946, %v946
    %v1103 = vmul.f32 %v947, %v947
    %v1104 = vmul.f32 %v948, %v948
    %v1105 = vmul.f32 %v949, %v949
    %v1106 = vmul.f32 %v950, %v950
    %v1107 = vmul.f32 %v951, %v951
    %v1108 = vmul.f32 %v952, %v952
    %v1109 = vmul.f32 %v953, %v953
    %1110 = vmatprep.subr.mxu0 0.0
    %1111 = vmatpush1.xpose.msra.mxu0 0.0
    %1112 = vmatprep.subr.mxu0 0.0
    %1113 = vmatpush1.xpose.msra.mxu0 0.0
    %1114 = vmatprep.subr.mxu0 0.0
    %1115 = vmatpush1.xpose.msra.mxu0 0.0
    %1116 = vmatprep.subr.mxu0 0.0
    %1117 = vmatpush1.xpose.msra.mxu0 0.0
    %1118 = vmatprep.subr.mxu0 0.0
    %1119 = vmatpush1.xpose.msra.mxu0 0.0
    %1120 = vmatprep.subr.mxu0 0.0
    %1121 = vmatpush1.xpose.msra.mxu0 0.0
    %1122 = vmatprep.subr.mxu0 0.0
    %1123 = vmatpush1.xpose.msra.mxu0 0.0
    %1124 = vmatprep.subr.mxu0 0.0
    %1125 = vmatpush1.xpose.msra.mxu0 0.0
    %1126 = vmatprep.subr.mxu0 0.0
    %1127 = vmatpush1.xpose.msra.mxu0 0.0
    %1128 = vmatprep.subr.mxu0 0.0
    %1129 = vmatpush1.xpose.msra.mxu0 0.0
    %1130 = vmatprep.subr.mxu0 0.0
    %1131 = vmatpush1.xpose.msra.mxu0 0.0
    %1132 = vmatprep.subr.mxu0 0.0
    %1133 = vmatpush1.xpose.msra.mxu0 0.0
    %1134 = vmatprep.subr.mxu0 %v1107
    %1135 = vmatpush1.xpose.msra.mxu0 %v1106
    %1136 = vmatprep.subr.mxu0 %v1103
    %1137 = vmatpush1.xpose.msra.mxu0 %v1102
    %1138 = vmatprep.subr.mxu0 %v1099
    %1139 = vmatpush1.xpose.msra.mxu0 %v1098
    %1140 = vmatprep.subr.mxu0 %v1095
    %1141 = vmatpush1.xpose.msra.mxu0 %v1094
    %1142 = vmatprep.subr.mxu0 0.0
    %1143 = vmatpush2.xpose.msra.mxu0 0.0
    %1144 = vmatprep.subr.mxu0 0.0
    %1145 = vmatpush2.xpose.msra.mxu0 0.0
    %1146 = vmatprep.subr.mxu0 0.0
    %1147 = vmatpush2.xpose.msra.mxu0 0.0
    %1148 = vmatprep.subr.mxu0 0.0
    %1149 = vmatpush2.xpose.msra.mxu0 0.0
    %1150 = vmatprep.subr.mxu0 0.0
    %1151 = vmatpush2.xpose.msra.mxu0 0.0
    %1152 = vmatprep.subr.mxu0 0.0
    %1153 = vmatpush2.xpose.msra.mxu0 0.0
    %1154 = vmatprep.subr.mxu0 0.0
    %1155 = vmatpush2.xpose.msra.mxu0 0.0
    %1156 = vmatprep.subr.mxu0 0.0
    %1157 = vmatpush2.xpose.msra.mxu0 0.0
    %1158 = vmatprep.subr.mxu0 0.0
    %1159 = vmatpush2.xpose.msra.mxu0 0.0
    %1160 = vmatprep.subr.mxu0 0.0
    %1161 = vmatpush2.xpose.msra.mxu0 0.0
    %1162 = vmatprep.subr.mxu0 0.0
    %1163 = vmatpush2.xpose.msra.mxu0 0.0
    %1164 = vmatprep.subr.mxu0 0.0
    %1165 = vmatpush2.xpose.msra.mxu0 0.0
    %1166 = vmatprep.subr.mxu0 0.0
    %1167 = vmatpush2.xpose.msra.mxu0 0.0
    %1168 = vmatprep.subr.mxu0 0.0
    %1169 = vmatpush2.xpose.msra.mxu0 0.0
    %1170 = vmatprep.subr.mxu0 0.0
    %1171 = vmatpush2.xpose.msra.mxu0 0.0
    %1172 = vmatprep.subr.mxu0 0.0
    %1173 = vmatpush2.xpose.msra.mxu0 0.0
    %1174 = vmatprep.mubr.f32.mxu0 1.0
    %1175 = vmatmul.mubr.f32.gmra.mxu0 1.0
    %v1176 = vpop.f32.mrf.mxu0
    %v1177 = vadd.f32 0.0, %v1176
    %v1178 = vpop.f32.mrf.mxu0
    %1179 = vdwg.mxu0
    %1180 = vmatprep.subr.mxu0 0.0
    %1181 = vmatpush1.xpose.msra.mxu0 0.0
    %1182 = vmatprep.subr.mxu0 0.0
    %1183 = vmatpush1.xpose.msra.mxu0 0.0
    %1184 = vmatprep.subr.mxu0 0.0
    %1185 = vmatpush1.xpose.msra.mxu0 0.0
    %1186 = vmatprep.subr.mxu0 0.0
    %1187 = vmatpush1.xpose.msra.mxu0 0.0
    %1188 = vmatprep.subr.mxu0 0.0
    %1189 = vmatpush1.xpose.msra.mxu0 0.0
    %1190 = vmatprep.subr.mxu0 0.0
    %1191 = vmatpush1.xpose.msra.mxu0 0.0
    %1192 = vmatprep.subr.mxu0 0.0
    %1193 = vmatpush1.xpose.msra.mxu0 0.0
    %1194 = vmatprep.subr.mxu0 0.0
    %1195 = vmatpush1.xpose.msra.mxu0 0.0
    %1196 = vmatprep.subr.mxu0 0.0
    %1197 = vmatpush1.xpose.msra.mxu0 0.0
    %1198 = vmatprep.subr.mxu0 0.0
    %1199 = vmatpush1.xpose.msra.mxu0 0.0
    %1200 = vmatprep.subr.mxu0 0.0
    %1201 = vmatpush1.xpose.msra.mxu0 0.0
    %1202 = vmatprep.subr.mxu0 0.0
    %1203 = vmatpush1.xpose.msra.mxu0 0.0
    %1204 = vmatprep.subr.mxu0 %v1109
    %1205 = vmatpush1.xpose.msra.mxu0 %v1108
    %1206 = vmatprep.subr.mxu0 %v1105
    %1207 = vmatpush1.xpose.msra.mxu0 %v1104
    %1208 = vmatprep.subr.mxu0 %v1101
    %1209 = vmatpush1.xpose.msra.mxu0 %v1100
    %1210 = vmatprep.subr.mxu0 %v1097
    %1211 = vmatpush1.xpose.msra.mxu0 %v1096
    %1212 = vmatprep.subr.mxu0 0.0
    %1213 = vmatpush2.xpose.msra.mxu0 0.0
    %1214 = vmatprep.subr.mxu0 0.0
    %1215 = vmatpush2.xpose.msra.mxu0 0.0
    %1216 = vmatprep.subr.mxu0 0.0
    %1217 = vmatpush2.xpose.msra.mxu0 0.0
    %1218 = vmatprep.subr.mxu0 0.0
    %1219 = vmatpush2.xpose.msra.mxu0 0.0
    %1220 = vmatprep.subr.mxu0 0.0
    %1221 = vmatpush2.xpose.msra.mxu0 0.0
    %1222 = vmatprep.subr.mxu0 0.0
    %1223 = vmatpush2.xpose.msra.mxu0 0.0
    %1224 = vmatprep.subr.mxu0 0.0
    %1225 = vmatpush2.xpose.msra.mxu0 0.0
    %1226 = vmatprep.subr.mxu0 0.0
    %1227 = vmatpush2.xpose.msra.mxu0 0.0
    %1228 = vmatprep.subr.mxu0 0.0
    %1229 = vmatpush2.xpose.msra.mxu0 0.0
    %1230 = vmatprep.subr.mxu0 0.0
    %1231 = vmatpush2.xpose.msra.mxu0 0.0
    %1232 = vmatprep.subr.mxu0 0.0
    %1233 = vmatpush2.xpose.msra.mxu0 0.0
    %1234 = vmatprep.subr.mxu0 0.0
    %1235 = vmatpush2.xpose.msra.mxu0 0.0
    %1236 = vmatprep.subr.mxu0 0.0
    %1237 = vmatpush2.xpose.msra.mxu0 0.0
    %1238 = vmatprep.subr.mxu0 0.0
    %1239 = vmatpush2.xpose.msra.mxu0 0.0
    %1240 = vmatprep.subr.mxu0 0.0
    %1241 = vmatpush2.xpose.msra.mxu0 0.0
    %1242 = vmatprep.subr.mxu0 0.0
    %1243 = vmatpush2.xpose.msra.mxu0 0.0
    %1244 = vmatprep.mubr.f32.mxu0 1.0
    %1245 = vmatmul.mubr.f32.gmra.mxu0 1.0
    %v1246 = vpop.f32.mrf.mxu0
    %v1247 = vadd.f32 %v1177, %v1246
    %v1248 = vpop.f32.mrf.mxu0
    %1249 = vdwg.mxu0
    %v1251 = vrot.slane %v1247, 7
    %v1253 = vsel %vm651, %v1091, %v1251
    %v1254 = vmul.f32 %v1253, 0.001953125
    %v1255 = vmul.f32 %v1254, %v1254
    %v1257 = vrot.slane %v1255, 7
    %v1259 = vsub.f32 %v1254, %v1257
    %v1260 = vld [vmem:[%s7] sm:$0x1]
    %v1261 = vadd.f32 %v1259, 1e-05
    %v1262 = vrsqrt.pop %v1261
    %v1265 = vunpack.c.l.s4 1966171168
    %v1266 = vunpack.c.0.s8 %v1265
    %v1267 = vlaneseq
    %v1268 = vshrl.u32 %v1267, 7
    %v1269 = vsub.s32 %v1266, %v1268
    %v1270 = vrot.slane %v1262, %v1269
    %v1271 = vcombine.high %v1270, %v1270
    %v1273 = vunpack.c.l.s4 1966171168
    %v1274 = vunpack.c.0.s8 %v1273
    %v1275 = vlaneseq
    %v1276 = vshrl.u32 %v1275, 7
    %v1277 = vsub.s32 %v1274, %v1276
    %v1278 = vrot.slane %v1271, %v1277
    %v1280 = vmul.f32 %v1260, %v1278
    %v1281 = vld [vmem:[%s8] sm:$0x1]
    %v1282 = vmul.f32 %v1254, %v1280
    %v1283 = vsub.f32 %v1281, %v1282
    %v1284 = vld [vmem:[%s9] sm:$0x1]
    %v1285 = vmul.f32 %v1284, %v1280
    %v1286 = vld [vmem:[#allocation2] sm:$0x1]
    %v1287 = vmul.f32 %v1284, %v1283
    %vm1288 = vcmask 253952
    %v1289 = vsel %vm1288, %v1287, 0.0
    %1290 = vadd.xlane.f32.xlu0 %v1289
    %v1291 = vpop.xlane.xlu0 %1290
    %v1292 = vadd.f32 %v1286, %v1291
    %1294 = vset.pattern.permute.xlu0 0
    %1295 = vperm.xlu0 %1294, %v1292
    %v1296 = vpop.permute.xlu0 %1295
    %v1298 = vlaneseq
    %v1299 = vshrl.u32 %v1298, 7
    %v1300 = vsub.s32 0, %v1299
    %v1301 = vrot.slane %v1296, %v1300
    %v1303 = vsel %vm711, %v1285, 0
    %1305 = vmatprep.subr.mxu0 0.0
    %1306 = vmatpush1.msra.mxu0 0.0
    %1307 = vmatprep.subr.mxu0 0.0
    %1308 = vmatpush1.msra.mxu0 0.0
    %1309 = vmatprep.subr.mxu0 0.0
    %1310 = vmatpush1.msra.mxu0 0.0
    %1311 = vmatprep.subr.mxu0 0.0
    %1312 = vmatpush1.msra.mxu0 0.0
    %1313 = vmatprep.subr.mxu0 0.0
    %1314 = vmatpush1.msra.mxu0 0.0
    %1315 = vmatprep.subr.mxu0 0.0
    %1316 = vmatpush1.msra.mxu0 0.0
    %1317 = vmatprep.subr.mxu0 0.0
    %1318 = vmatpush1.msra.mxu0 0.0
    %1319 = vmatprep.subr.mxu0 0.0
    %1320 = vmatpush1.msra.mxu0 0.0
    %1321 = vmatprep.subr.mxu0 0.0
    %1322 = vmatpush1.msra.mxu0 0.0
    %1323 = vmatprep.subr.mxu0 0.0
    %1324 = vmatpush1.msra.mxu0 0.0
    %1325 = vmatprep.subr.mxu0 0.0
    %1326 = vmatpush1.msra.mxu0 0.0
    %1327 = vmatprep.subr.mxu0 0.0
    %1328 = vmatpush1.msra.mxu0 0.0
    %1329 = vmatprep.subr.mxu0 %v951
    %1330 = vmatpush1.msra.mxu0 %v950
    %1331 = vmatprep.subr.mxu0 %v947
    %1332 = vmatpush1.msra.mxu0 %v946
    %1333 = vmatprep.subr.mxu0 %v943
    %1334 = vmatpush1.msra.mxu0 %v942
    %1335 = vmatprep.subr.mxu0 %v939
    %1336 = vmatpush1.msra.mxu0 %v938
    %1337 = vmatprep.subr.mxu0 0.0
    %1338 = vmatpush2.msra.mxu0 0.0
    %1339 = vmatprep.subr.mxu0 0.0
    %1340 = vmatpush2.msra.mxu0 0.0
    %1341 = vmatprep.subr.mxu0 0.0
    %1342 = vmatpush2.msra.mxu0 0.0
    %1343 = vmatprep.subr.mxu0 0.0
    %1344 = vmatpush2.msra.mxu0 0.0
    %1345 = vmatprep.subr.mxu0 0.0
    %1346 = vmatpush2.msra.mxu0 0.0
    %1347 = vmatprep.subr.mxu0 0.0
    %1348 = vmatpush2.msra.mxu0 0.0
    %1349 = vmatprep.subr.mxu0 0.0
    %1350 = vmatpush2.msra.mxu0 0.0
    %1351 = vmatprep.subr.mxu0 0.0
    %1352 = vmatpush2.msra.mxu0 0.0
    %1353 = vmatprep.subr.mxu0 0.0
    %1354 = vmatpush2.msra.mxu0 0.0
    %1355 = vmatprep.subr.mxu0 0.0
    %1356 = vmatpush2.msra.mxu0 0.0
    %1357 = vmatprep.subr.mxu0 0.0
    %1358 = vmatpush2.msra.mxu0 0.0
    %1359 = vmatprep.subr.mxu0 0.0
    %1360 = vmatpush2.msra.mxu0 0.0
    %1361 = vmatprep.subr.mxu0 0.0
    %1362 = vmatpush2.msra.mxu0 0.0
    %1363 = vmatprep.subr.mxu0 0.0
    %1364 = vmatpush2.msra.mxu0 0.0
    %1365 = vmatprep.subr.mxu0 0.0
    %1366 = vmatpush2.msra.mxu0 0.0
    %1367 = vmatprep.subr.mxu0 0.0
    %1368 = vmatpush2.msra.mxu0 0.0
    %1369 = vmatprep.mubr.f32.mxu0 0.0
    %1370 = vmatmul.mubr.f32.gmra.mxu0 %v1303
    %v1371 = vpop.f32.mrf.mxu0
    %v1372 = vadd.f32 %v1301, %v1371
    %v1373 = vpop.f32.mrf.mxu0
    %v1374 = vadd.f32 %v1301, %v1373
    %1375 = vdwg.mxu0
    %1376 = vmatprep.subr.mxu0 0.0
    %1377 = vmatpush1.msra.mxu0 0.0
    %1378 = vmatprep.subr.mxu0 0.0
    %1379 = vmatpush1.msra.mxu0 0.0
    %1380 = vmatprep.subr.mxu0 0.0
    %1381 = vmatpush1.msra.mxu0 0.0
    %1382 = vmatprep.subr.mxu0 0.0
    %1383 = vmatpush1.msra.mxu0 0.0
    %1384 = vmatprep.subr.mxu0 0.0
    %1385 = vmatpush1.msra.mxu0 0.0
    %1386 = vmatprep.subr.mxu0 0.0
    %1387 = vmatpush1.msra.mxu0 0.0
    %1388 = vmatprep.subr.mxu0 0.0
    %1389 = vmatpush1.msra.mxu0 0.0
    %1390 = vmatprep.subr.mxu0 0.0
    %1391 = vmatpush1.msra.mxu0 0.0
    %1392 = vmatprep.subr.mxu0 0.0
    %1393 = vmatpush1.msra.mxu0 0.0
    %1394 = vmatprep.subr.mxu0 0.0
    %1395 = vmatpush1.msra.mxu0 0.0
    %1396 = vmatprep.subr.mxu0 0.0
    %1397 = vmatpush1.msra.mxu0 0.0
    %1398 = vmatprep.subr.mxu0 0.0
    %1399 = vmatpush1.msra.mxu0 0.0
    %1400 = vmatprep.subr.mxu0 %v953
    %1401 = vmatpush1.msra.mxu0 %v952
    %1402 = vmatprep.subr.mxu0 %v949
    %1403 = vmatpush1.msra.mxu0 %v948
    %1404 = vmatprep.subr.mxu0 %v945
    %1405 = vmatpush1.msra.mxu0 %v944
    %1406 = vmatprep.subr.mxu0 %v941
    %1407 = vmatpush1.msra.mxu0 %v940
    %1408 = vmatprep.subr.mxu0 0.0
    %1409 = vmatpush2.msra.mxu0 0.0
    %1410 = vmatprep.subr.mxu0 0.0
    %1411 = vmatpush2.msra.mxu0 0.0
    %1412 = vmatprep.subr.mxu0 0.0
    %1413 = vmatpush2.msra.mxu0 0.0
    %1414 = vmatprep.subr.mxu0 0.0
    %1415 = vmatpush2.msra.mxu0 0.0
    %1416 = vmatprep.subr.mxu0 0.0
    %1417 = vmatpush2.msra.mxu0 0.0
    %1418 = vmatprep.subr.mxu0 0.0
    %1419 = vmatpush2.msra.mxu0 0.0
    %1420 = vmatprep.subr.mxu0 0.0
    %1421 = vmatpush2.msra.mxu0 0.0
    %1422 = vmatprep.subr.mxu0 0.0
    %1423 = vmatpush2.msra.mxu0 0.0
    %1424 = vmatprep.subr.mxu0 0.0
    %1425 = vmatpush2.msra.mxu0 0.0
    %1426 = vmatprep.subr.mxu0 0.0
    %1427 = vmatpush2.msra.mxu0 0.0
    %1428 = vmatprep.subr.mxu0 0.0
    %1429 = vmatpush2.msra.mxu0 0.0
    %1430 = vmatprep.subr.mxu0 0.0
    %1431 = vmatpush2.msra.mxu0 0.0
    %1432 = vmatprep.subr.mxu0 0.0
    %1433 = vmatpush2.msra.mxu0 0.0
    %1434 = vmatprep.subr.mxu0 0.0
    %1435 = vmatpush2.msra.mxu0 0.0
    %1436 = vmatprep.subr.mxu0 0.0
    %1437 = vmatpush2.msra.mxu0 0.0
    %1438 = vmatprep.subr.mxu0 0.0
    %1439 = vmatpush2.msra.mxu0 0.0
    %1440 = vmatprep.mubr.f32.mxu0 0.0
    %1441 = vmatmul.mubr.f32.gmra.mxu0 %v1303
    %v1442 = vpop.f32.mrf.mxu0
    %v1443 = vadd.f32 %v1301, %v1442
    %v1444 = vpop.f32.mrf.mxu0
    %v1445 = vadd.f32 %v1301, %v1444
    %1446 = vdwg.mxu0
    %v1451 = vcombine.low %v1372, %v1374
    %v1452 = vcombine.low %v1443, %v1445
    %v1454 = vunpack.c.l.s4 1966171168
    %v1455 = vunpack.c.0.s8 %v1454
    %v1456 = vlaneseq
    %v1457 = vshrl.u32 %v1456, 7
    %v1458 = vsub.s32 %v1455, %v1457
    %v1459 = vrot.slane %v1451, %v1458
    %v1461 = vunpack.c.l.s4 1966171168
    %v1462 = vunpack.c.0.s8 %v1461
    %v1463 = vlaneseq
    %v1464 = vshrl.u32 %v1463, 7
    %v1465 = vsub.s32 %v1462, %v1464
    %v1466 = vrot.slane %v1452, %v1465
    %v1467 = vcombine.low %v1459, %v1466
    %v1469 = vunpack.c.l.s4 1966171168
    %v1470 = vunpack.c.0.s8 %v1469
    %v1471 = vlaneseq
    %v1472 = vshrl.u32 %v1471, 7
    %v1473 = vsub.s32 %v1470, %v1472
    %v1474 = vrot.slane %v1467, %v1473
    %v1476 = vlaneseq
    %vm1477 = vcmp.ge.s32.totalorder %v1476, 0
    %vm1478 = vcmp.lt.s32.totalorder %v1476, 512
    %vm1479 = vmand %vm1477, %vm1478
    %1480 = vst.msk [vmem:[#allocation12] sm:$0xf] %vm1479, %v1474
    // Predicated region
    $region66: #{_lambda_.1} parent=1 // pred_check
      _
    $region67: #{_lambda_.1} parent=1 // pred_check_branch
      %1482 = sbr.rel (0) target = $region69
    $region68: #{_lambda_.1} parent=1 // pred_region
      %s1484 = ssub.s32 64, 64
      %1485 = vsyncadd [#allocation5], %s1484
      %s1487 = sshll.u32 [#allocation12], 4
      %s1488 = int_to_ptr.vmem [resolvable:$true] %s1487
      %1490 = dma.vmem_to_hbm [thread:$0]  %s1488, 64, %s11, [#allocation5]
    $region69: #{_lambda_.1} parent=1 // pred_fallthru
      _
    // Predicated region
    $region70: #{_lambda_.1} parent=1 // pred_check
      _
    $region71: #{_lambda_.1} parent=1 // pred_check_branch
      %1492 = sbr.rel (0) target = $region73
    $region72: #{_lambda_.1} parent=1 // pred_region
      %1493 = dma.done [#allocation5], 64
    $region73: #{_lambda_.1} parent=1 // pred_fallthru
      _
    %1494 = vsyncpa [#allocation4], 1
    %1495 = vsyncpa [#allocation7], 1
    %1496 = vsyncpa [#allocation10], 1
    %1497 = vsyncpa [#allocation5], 1

</llo_original>
